<compile_context>
chip_gen: v5e
topology: v5e:2x2
jax: 0.10.0
libtpu: 0.0.40
codegen_flags: <defaults>
</compile_context>

<pallas_src>
import functools

import jax
import jax.numpy as jnp
from jax.experimental import pallas as pl
from jax.experimental.pallas import tpu as pltpu


def _round_up(n: int, m: int) -> int:
    return (n + m - 1) // m * m


def _vmem_capacity_bytes(default: int = 64 * 1024 * 1024) -> int:
    # Per-generation VMEM (v5e/v6e: 128 MiB, v7x: 64 MiB); fall back safely.
    try:
        return int(pltpu.get_tpu_info().vmem_capacity_bytes)
    except Exception:
        return default


def _discriminator_kernel(x_ref, w1_ref, b1_ref, w2_ref, b2_ref, o_ref):
    # x tile arrives as f32; cast to bf16 on the VPU (cast slot is not the
    # bottleneck) so both matmuls use the MXU bf16 path with f32 accumulation.
    x = x_ref[...].astype(jnp.bfloat16)
    # dense1 -> sigmoid (EUP).
    h = jnp.dot(x, w1_ref[...], preferred_element_type=jnp.float32)
    h = jax.nn.sigmoid(h + b1_ref[...])
    # TODO(synk): dropout is identity (eval mode / p=0); a training-mode path
    # would draw a mask with pltpu.prng_random_bits here.
    # dense2 -> outer nn.Sigmoid().
    y = jnp.dot(h.astype(jnp.bfloat16), w2_ref[...],
                preferred_element_type=jnp.float32)
    o_ref[...] = jax.nn.sigmoid(y + b2_ref[...]).astype(o_ref.dtype)


@functools.partial(jax.jit, static_argnames=("block_b", "out_dtype"))
def discriminator_forward(x, w1, b1, w2, b2, *, block_b=512,
                          out_dtype=jnp.bfloat16):
    """x: [B, input_size] f32; w1: [K, 2D] bf16; b1: [1, 2D] f32;
    w2: [2D, D] bf16; b2: [1, D] f32. Returns [B, D] `out_dtype`."""
    B, K = x.shape
    H = w1.shape[1]
    N = w2.shape[1]

    # --- Pad K / H / N to lane-dense multiples of 128. Zero-padding is exact:
    # padded x / w1-row entries contribute 0, padded w2 rows are zero, padded
    # output columns are sliced off below. No-op for aligned shapes. ---
    Kp, Hp, Np = _round_up(K, 128), _round_up(H, 128), _round_up(N, 128)
    if Kp != K:
        x = jnp.pad(x, ((0, 0), (0, Kp - K)))
        w1 = jnp.pad(w1, ((0, Kp - K), (0, 0)))
    if Hp != H:
        w1 = jnp.pad(w1, ((0, 0), (0, Hp - H)))
        b1 = jnp.pad(b1, ((0, 0), (0, Hp - H)))
        w2 = jnp.pad(w2, ((0, Hp - H), (0, 0)))
    if Np != N:
        w2 = jnp.pad(w2, ((0, 0), (0, Np - N)))
        b2 = jnp.pad(b2, ((0, 0), (0, Np - N)))

    out_itemsize = jnp.dtype(out_dtype).itemsize

    # --- VMEM budget / batch-tile selection. Weights & biases are
    # single-buffered residents; x / out tiles are double-buffered. ---
    resident = (Kp * Hp + Hp * Np) * 2 + (Hp + Np) * 4      # bf16 W, f32 b
    per_row = (2 * Kp * 4                  # x tile (f32), 2 buffers
               + 2 * Np * out_itemsize     # out tile, 2 buffers
               + Kp * 2                    # bf16 copy of x
               + Hp * (4 + 2)              # f32 hidden + its bf16 copy
               + Np * 4)                   # f32 pre-sigmoid logits
    budget = int(0.85 * _vmem_capacity_bytes())   # headroom for Mosaic scratch
    tb_cap = (budget - resident) // per_row // 16 * 16

    if B <= 16:
        tb = B
    else:
        tb = min(block_b, B)
        if tb >= B:
            # Keep >= 2 grid steps so ("parallel",) can use both TCs on v7x.
            tb = _round_up((B + 1) // 2, 16)
        tb = max(16, min(tb, max(16, tb_cap)))

    grid = (pl.cdiv(B, tb),)

    vmem_limit = int(min(budget,
                         max(32 * 1024 * 1024,
                             int(1.2 * (resident + tb * per_row)))))

    cost = pl.CostEstimate(
        flops=2 * B * (Kp * Hp + Hp * Np),
        transcendentals=B * (Hp + Np),
        bytes_accessed=(B * Kp * 4 + (Kp * Hp + Hp * Np) * 2
                        + (Hp + Np) * 4 + B * Np * out_itemsize),
    )

    def resident_spec(shape):
        # Constant index_map + single buffering: true VMEM residents.
        return pl.BlockSpec(shape, lambda i: (0, 0),
                            pipeline_mode=pl.Buffered(1))

    out = pl.pallas_call(
        _discriminator_kernel,
        out_shape=jax.ShapeDtypeStruct((B, Np), out_dtype),
        grid=grid,
        in_specs=[
            pl.BlockSpec((tb, Kp), lambda i: (i, 0)),  # x: batch-tiled, pipelined
            resident_spec((Kp, Hp)),                   # w1
            resident_spec((1, Hp)),                    # b1
            resident_spec((Hp, Np)),                   # w2
            resident_spec((1, Np)),                    # b2
        ],
        out_specs=pl.BlockSpec((tb, Np), lambda i: (i, 0)),
        compiler_params=pltpu.CompilerParams(
            dimension_semantics=("parallel",),
            vmem_limit_bytes=vmem_limit,
        ),
        cost_estimate=cost,
    )(x, w1, b1, w2, b2)

    return out[:, :N] if Np != N else out


def init_params(key, input_size, domain_size):
    """nn.Linear-style U(-1/sqrt(fan_in), 1/sqrt(fan_in)) init. Weights are
    stored transposed vs. PyTorch and in bf16 (MXU-native); biases kept f32
    as [1, dim] rows for clean 2-D broadcasting."""
    hidden = 2 * domain_size
    k1, k2, k3, k4 = jax.random.split(key, 4)
    lim1 = 1.0 / float(input_size) ** 0.5
    lim2 = 1.0 / float(hidden) ** 0.5
    w1 = jax.random.uniform(k1, (input_size, hidden), jnp.float32, -lim1, lim1)
    b1 = jax.random.uniform(k2, (1, hidden), jnp.float32, -lim1, lim1)
    w2 = jax.random.uniform(k3, (hidden, domain_size), jnp.float32, -lim2, lim2)
    b2 = jax.random.uniform(k4, (1, domain_size), jnp.float32, -lim2, lim2)
    return w1.astype(jnp.bfloat16), b1, w2.astype(jnp.bfloat16), b2


def reference_forward(x, w1, b1, w2, b2):
    """Pure-JAX reference mirroring the kernel's bf16 value rounding (x,
    weights, hidden activation) while doing the matmuls in f32; the remaining
    deltas are MXU accumulation order and the bf16 output rounding."""
    xf = x.astype(jnp.bfloat16).astype(jnp.float32)
    w1f = w1.astype(jnp.float32)
    w2f = w2.astype(jnp.float32)
    h = jax.nn.sigmoid(xf @ w1f + b1)
    h = h.astype(jnp.bfloat16).astype(jnp.float32)
    return jax.nn.sigmoid(h @ w2f + b2)


if __name__ == "__main__":
    key = jax.random.PRNGKey(0)
    kx, kp, kx2, kp2 = jax.random.split(key, 4)

    # --- Aligned demo: lane-dense output, full MXU tiles, 2-step batch grid
    # (tb = 128) so both v7x TensorCores get work. ---
    batch, input_size, domain_size = 256, 256, 128
    x = jax.random.normal(kx, (batch, input_size), jnp.float32)
    w1, b1, w2, b2 = init_params(kp, input_size, domain_size)

    out = jax.block_until_ready(discriminator_forward(x, w1, b1, w2, b2))
    ref = reference_forward(x, w1, b1, w2, b2)
    assert out.shape == (batch, domain_size)
    assert out.dtype == jnp.bfloat16
    err = float(jnp.max(jnp.abs(out.astype(jnp.float32) - ref)))
    assert err < 1e-2, err

    # --- Ragged / lane-sparse shapes: exercises K/H/N zero-padding and a
    # partial trailing batch tile. ---
    batch2, input_size2, domain_size2 = 100, 96, 48
    x2 = jax.random.normal(kx2, (batch2, input_size2), jnp.float32)
    p2 = init_params(kp2, input_size2, domain_size2)
    out2 = jax.block_until_ready(discriminator_forward(x2, *p2))
    ref2 = reference_forward(x2, *p2)
    assert out2.shape == (batch2, domain_size2)
    err2 = float(jnp.max(jnp.abs(out2.astype(jnp.float32) - ref2)))
    assert err2 < 1e-2, err2

    print("KERNEL_OK")
</pallas_src>

<mosaic_0001>
module attributes {stable_mosaic.version = 11 : i64} {
  func.func @_discriminator_kernel(%arg0: i32, %arg1: memref<128x256xf32, #tpu.memory_space<vmem>>, %arg2: memref<256x256xbf16, #tpu.memory_space<vmem>>, %arg3: memref<1x256xf32, #tpu.memory_space<vmem>>, %arg4: memref<256x128xbf16, #tpu.memory_space<vmem>>, %arg5: memref<1x128xf32, #tpu.memory_space<vmem>>, %arg6: memref<128x128xbf16, #tpu.memory_space<vmem>>) attributes {dimension_semantics = [#tpu.dimension_semantics<parallel>], iteration_bounds = array<i64: 2>, scalar_prefetch = 0 : i64, scratch_operands = 0 : i64, tpu.core_type = #tpu.core_type<tc>, window_params = [{transform_indices = @transform_0, window_bounds = array<i64: 128, 256>}, {pipeline_mode = #tpu.pipeline_mode<synchronous>, transform_indices = @transform_1, window_bounds = array<i64: 256, 256>}, {pipeline_mode = #tpu.pipeline_mode<synchronous>, transform_indices = @transform_2, window_bounds = array<i64: 1, 256>}, {pipeline_mode = #tpu.pipeline_mode<synchronous>, transform_indices = @transform_3, window_bounds = array<i64: 256, 128>}, {pipeline_mode = #tpu.pipeline_mode<synchronous>, transform_indices = @transform_4, window_bounds = array<i64: 1, 128>}, {transform_indices = @transform_5, window_bounds = array<i64: 128, 128>}]} {
    %c0 = arith.constant 0 : index
    %c0_0 = arith.constant 0 : index
    %0 = vector.load %arg1[%c0, %c0_0] : memref<128x256xf32, #tpu.memory_space<vmem>>, vector<128x256xf32>
    %1 = arith.truncf %0 : vector<128x256xf32> to vector<128x256xbf16>
    %c0_1 = arith.constant 0 : index
    %c0_2 = arith.constant 0 : index
    %2 = vector.load %arg2[%c0_1, %c0_2] : memref<256x256xbf16, #tpu.memory_space<vmem>>, vector<256x256xbf16>
    %cst = arith.constant dense<0.000000e+00> : vector<128x256xf32>
    %3 = tpu.matmul %1, %2, %cst {dimension_numbers = #tpu.dot_dimension_numbers<[1], [0], [0], [1], [0, 0, 1, 1], [], []>} : vector<128x256xbf16>, vector<256x256xbf16>, vector<128x256xf32> -> vector<128x256xf32>
    %c0_3 = arith.constant 0 : index
    %c0_4 = arith.constant 0 : index
    %4 = vector.load %arg3[%c0_3, %c0_4] : memref<1x256xf32, #tpu.memory_space<vmem>>, vector<1x256xf32>
    %5 = vector.broadcast %4 : vector<1x256xf32> to vector<128x256xf32>
    %6 = arith.addf %3, %5 : vector<128x256xf32>
    %7 = arith.negf %6 : vector<128x256xf32>
    %8 = math.exp %7 : vector<128x256xf32>
    %cst_5 = arith.constant 1.000000e+00 : f32
    %9 = vector.broadcast %cst_5 : f32 to vector<128x256xf32>
    %10 = arith.addf %9, %8 : vector<128x256xf32>
    %11 = arith.divf %9, %10 : vector<128x256xf32>
    %12 = arith.truncf %11 : vector<128x256xf32> to vector<128x256xbf16>
    %c0_6 = arith.constant 0 : index
    %c0_7 = arith.constant 0 : index
    %13 = vector.load %arg4[%c0_6, %c0_7] : memref<256x128xbf16, #tpu.memory_space<vmem>>, vector<256x128xbf16>
    %cst_8 = arith.constant dense<0.000000e+00> : vector<128x128xf32>
    %14 = tpu.matmul %12, %13, %cst_8 {dimension_numbers = #tpu.dot_dimension_numbers<[1], [0], [0], [1], [0, 0, 1, 1], [], []>} : vector<128x256xbf16>, vector<256x128xbf16>, vector<128x128xf32> -> vector<128x128xf32>
    %c0_9 = arith.constant 0 : index
    %c0_10 = arith.constant 0 : index
    %15 = vector.load %arg5[%c0_9, %c0_10] : memref<1x128xf32, #tpu.memory_space<vmem>>, vector<1x128xf32>
    %16 = vector.broadcast %15 : vector<1x128xf32> to vector<128x128xf32>
    %17 = arith.addf %14, %16 : vector<128x128xf32>
    %18 = arith.negf %17 : vector<128x128xf32>
    %19 = math.exp %18 : vector<128x128xf32>
    %cst_11 = arith.constant 1.000000e+00 : f32
    %20 = vector.broadcast %cst_11 : f32 to vector<128x128xf32>
    %21 = arith.addf %20, %19 : vector<128x128xf32>
    %22 = arith.divf %20, %21 : vector<128x128xf32>
    %23 = arith.truncf %22 : vector<128x128xf32> to vector<128x128xbf16>
    %c0_12 = arith.constant 0 : index
    %c0_13 = arith.constant 0 : index
    %24 = vector.load %arg6[%c0_12, %c0_13] : memref<128x128xbf16, #tpu.memory_space<vmem>>, vector<128x128xbf16>
    tpu.vector_store %arg6[%c0_12, %c0_13], %23 {strides = array<i32>} : memref<128x128xbf16, #tpu.memory_space<vmem>>, vector<128x128xbf16>,
    return
  }
  func.func @transform_0(%arg0: i32) -> (i32, i32) {
    %c0_i32 = arith.constant 0 : i32
    %c0_i32_0 = arith.constant 0 : i32
    return %arg0, %c0_i32 : i32, i32
  }
  func.func @transform_1(%arg0: i32) -> (i32, i32) {
    %c0_i32 = arith.constant 0 : i32
    %c0_i32_0 = arith.constant 0 : i32
    %c0_i32_1 = arith.constant 0 : i32
    return %c0_i32, %c0_i32_0 : i32, i32
  }
  func.func @transform_2(%arg0: i32) -> (i32, i32) {
    %c0_i32 = arith.constant 0 : i32
    %c0_i32_0 = arith.constant 0 : i32
    %c0_i32_1 = arith.constant 0 : i32
    return %c0_i32, %c0_i32_0 : i32, i32
  }
  func.func @transform_3(%arg0: i32) -> (i32, i32) {
    %c0_i32 = arith.constant 0 : i32
    %c0_i32_0 = arith.constant 0 : i32
    %c0_i32_1 = arith.constant 0 : i32
    return %c0_i32, %c0_i32_0 : i32, i32
  }
  func.func @transform_4(%arg0: i32) -> (i32, i32) {
    %c0_i32 = arith.constant 0 : i32
    %c0_i32_0 = arith.constant 0 : i32
    %c0_i32_1 = arith.constant 0 : i32
    return %c0_i32, %c0_i32_0 : i32, i32
  }
  func.func @transform_5(%arg0: i32) -> (i32, i32) {
    %c0_i32 = arith.constant 0 : i32
    %c0_i32_0 = arith.constant 0 : i32
    return %arg0, %c0_i32 : i32, i32
  }
}

</mosaic_0001>

<llo_original>
// kernel: discriminator_forward.1
$region0: #{discriminator_forward.1}
  #allocation0 [shape = 'u32[]', space=smem, size = 0x4, offset = 0x4, fixed_abs, tag = 'smem constant byte address 0x4 - core index']
  #allocation1 [shape = 'u32[72,128]{1,0:T(1,128)}', space=vmem, size = 0x9000, scoped, tag = 'internal scratch']
  %s0 = inlined_call_operand.hbm [shape: f32[256,256], index: 0, kind: input, shape index: {}]
  %s1 = inlined_call_operand.hbm [shape: bf16[256,256], index: 1, kind: input, shape index: {}]
  %s2 = inlined_call_operand.hbm [shape: f32[1,256], index: 2, kind: input, shape index: {}]
  %s3 = inlined_call_operand.hbm [shape: bf16[256,128], index: 3, kind: input, shape index: {}]
  %s4 = inlined_call_operand.vmem [shape: f32[1,128], index: 4, kind: input, shape index: {}]
  %s5 = inlined_call_operand.hbm [shape: bf16[256,128], index: 5, kind: output, shape index: {}]
  %s6 = sld [smem:[#allocation0]]
  $region69: #{discriminator_forward.1} parent=0
    _
  %s8 = ssub.s32 1, %s6
  %s9 = scalar_select 0, %s8, %s6
  $region1: #{discriminator_forward.1} parent=0
    #allocation2 [shape = 'u8[262144]{0}', space=vmem, size = 0x40000, scoped, tag = 'input window, operand 0']
    #allocation3 [shape = 's32[2]{0}', space=sflag, size = 0x8, scoped, tag = 'scoped memory for discriminator_forward.1']
    #allocation4 [shape = 's32[2]{0}', space=sflag, size = 0x8, scoped, tag = 'scoped memory for discriminator_forward.1']
    #allocation5 [shape = 'u8[131072]{0}', space=vmem, size = 0x20000, scoped, tag = 'input window, operand 1, single buffered']
    #allocation6 [shape = 's32[1]{0}', space=sflag, size = 0x4, scoped, tag = 'scoped memory for discriminator_forward.1']
    #allocation7 [shape = 'u8[1024]{0}', space=vmem, size = 0x400, scoped, tag = 'input window, operand 2, single buffered']
    #allocation8 [shape = 'u8[65536]{0}', space=vmem, size = 0x10000, scoped, tag = 'input window, operand 3, single buffered']
    #allocation9 [shape = 's32[1]{0}', space=sflag, size = 0x4, scoped, tag = 'scoped memory for discriminator_forward.1']
    #allocation10 [shape = 'u8[65536]{0}', space=vmem, size = 0x10000, scoped, tag = 'output window, operand 0']
    %10 = vsyncpa [#allocation3], 0
    %s11 = scalar_lea.sflag [#allocation3], 1
    %12 = vsyncpa %s11, 0
    %13 = vsyncpa [#allocation6], 0
    %14 = vsyncpa [#allocation9], 0
    %15 = vsyncpa [#allocation4], 0
    %s16 = scalar_lea.sflag [#allocation4], 1
    %17 = vsyncpa %s16, 0
    loop: start=0, step=1, limit=4
    $region2: #{discriminator_forward.1} parent=1 // loop_pre_header
      _
    $region3: #{discriminator_forward.1} parent=1 // loop_header
      %s19 = sphi 0, %s23
      %p20 = scmp.ge.s32.totalorder %s19, 4
      %s29 = sphi 0, %s31
      %s32 = sphi 0, %s29
      %s33 = sphi 0, %s32
      %s49 = sphi 0, %s33
      %s53 = sphi 0, %s53
      %s55 = sphi 0, %s53
      %s56 = sphi 0, %s55
      %s70 = sphi 0, %s56
      %s74 = sphi 0, %s74
      %s76 = sphi 0, %s74
      %s77 = sphi 0, %s76
      %s91 = sphi 0, %s77
      %s95 = sphi 0, %s95
      %s97 = sphi 0, %s95
      %s98 = sphi 0, %s97
      %s112 = sphi 0, %s98
      %s116 = sphi 0, %s116
      %s118 = sphi 0, %s116
      %s119 = sphi 0, %s118
      %s133 = sphi 0, %s119
      %s139 = sphi 0, %s141
      %s142 = sphi 0, %s139
      %s143 = sphi 0, %s142
      %s159 = sphi 0, %s143
    $region4: #{discriminator_forward.1} parent=1 // loop_header_branch
      %22 = sbr.rel (%p20) target = $region8
    $region5: #{discriminator_forward.1} parent=1 // loop_body
      %s24 = ssub.s32 %s19, 1
      %s25 = ssub.s32 %s19, 2
      %s26 = sadd.s32 %s19, 1
      %s27 = ssub.s32 %s19, %s26
      %p28 = scmp.eq.s32.totalorder %s27, 0
      %s30 = sadd.s32 %s29, 1
      %s31 = scalar_select %p28, %s29, %s30
      %p34 = pneg %p28
      %p35 = scmp.eq.s32.totalorder %s19, 1
      %p36 = por %p34, %p35
      %p37 = scmp.ne.s32.totalorder %s29, %s32
      %p38 = scmp.eq.s32.totalorder %s19, 0
      %p39 = por %p37, %p38
      %p40 = scmp.ne.s32.totalorder %s29, %s32
      %p41 = scmp.eq.s32.totalorder %s24, 1
      %p42 = por %p40, %p41
      %p43 = scmp.ne.s32.totalorder %s32, %s33
      %p44 = scmp.eq.s32.totalorder %s24, 0
      %p45 = por %p43, %p44
      %p46 = scmp.ne.s32.totalorder %s32, %s33
      %p47 = scmp.eq.s32.totalorder %s25, 1
      %p48 = por %p46, %p47
      %p50 = scmp.ne.s32.totalorder %s33, %s49
      %p51 = scmp.eq.s32.totalorder %s25, 0
      %p52 = por %p50, %p51
      %s54 = sadd.s32 %s53, 1
      %p57 = scmp.eq.s32.totalorder %s19, 1
      %p58 = scmp.ne.s32.totalorder %s53, %s55
      %p59 = scmp.eq.s32.totalorder %s19, 0
      %p60 = por %p58, %p59
      %p61 = scmp.ne.s32.totalorder %s53, %s55
      %p62 = scmp.eq.s32.totalorder %s24, 1
      %p63 = por %p61, %p62
      %p64 = scmp.ne.s32.totalorder %s55, %s56
      %p65 = scmp.eq.s32.totalorder %s24, 0
      %p66 = por %p64, %p65
      %p67 = scmp.ne.s32.totalorder %s55, %s56
      %p68 = scmp.eq.s32.totalorder %s25, 1
      %p69 = por %p67, %p68
      %p71 = scmp.ne.s32.totalorder %s56, %s70
      %p72 = scmp.eq.s32.totalorder %s25, 0
      %p73 = por %p71, %p72
      %s75 = sadd.s32 %s74, 1
      %p78 = scmp.eq.s32.totalorder %s19, 1
      %p79 = scmp.ne.s32.totalorder %s74, %s76
      %p80 = scmp.eq.s32.totalorder %s19, 0
      %p81 = por %p79, %p80
      %p82 = scmp.ne.s32.totalorder %s74, %s76
      %p83 = scmp.eq.s32.totalorder %s24, 1
      %p84 = por %p82, %p83
      %p85 = scmp.ne.s32.totalorder %s76, %s77
      %p86 = scmp.eq.s32.totalorder %s24, 0
      %p87 = por %p85, %p86
      %p88 = scmp.ne.s32.totalorder %s76, %s77
      %p89 = scmp.eq.s32.totalorder %s25, 1
      %p90 = por %p88, %p89
      %p92 = scmp.ne.s32.totalorder %s77, %s91
      %p93 = scmp.eq.s32.totalorder %s25, 0
      %p94 = por %p92, %p93
      %s96 = sadd.s32 %s95, 1
      %p99 = scmp.eq.s32.totalorder %s19, 1
      %p100 = scmp.ne.s32.totalorder %s95, %s97
      %p101 = scmp.eq.s32.totalorder %s19, 0
      %p102 = por %p100, %p101
      %p103 = scmp.ne.s32.totalorder %s95, %s97
      %p104 = scmp.eq.s32.totalorder %s24, 1
      %p105 = por %p103, %p104
      %p106 = scmp.ne.s32.totalorder %s97, %s98
      %p107 = scmp.eq.s32.totalorder %s24, 0
      %p108 = por %p106, %p107
      %p109 = scmp.ne.s32.totalorder %s97, %s98
      %p110 = scmp.eq.s32.totalorder %s25, 1
      %p111 = por %p109, %p110
      %p113 = scmp.ne.s32.totalorder %s98, %s112
      %p114 = scmp.eq.s32.totalorder %s25, 0
      %p115 = por %p113, %p114
      %s117 = sadd.s32 %s116, 1
      %p120 = scmp.eq.s32.totalorder %s19, 1
      %p121 = scmp.ne.s32.totalorder %s116, %s118
      %p122 = scmp.eq.s32.totalorder %s19, 0
      %p123 = por %p121, %p122
      %p124 = scmp.ne.s32.totalorder %s116, %s118
      %p125 = scmp.eq.s32.totalorder %s24, 1
      %p126 = por %p124, %p125
      %p127 = scmp.ne.s32.totalorder %s118, %s119
      %p128 = scmp.eq.s32.totalorder %s24, 0
      %p129 = por %p127, %p128
      %p130 = scmp.ne.s32.totalorder %s118, %s119
      %p131 = scmp.eq.s32.totalorder %s25, 1
      %p132 = por %p130, %p131
      %p134 = scmp.ne.s32.totalorder %s119, %s133
      %p135 = scmp.eq.s32.totalorder %s25, 0
      %p136 = por %p134, %p135
      %s137 = ssub.s32 %s19, %s26
      %p138 = scmp.eq.s32.totalorder %s137, 0
      %s140 = sadd.s32 %s139, 1
      %s141 = scalar_select %p138, %s139, %s140
      %p144 = pneg %p138
      %p145 = scmp.eq.s32.totalorder %s19, 1
      %p146 = por %p144, %p145
      %p147 = scmp.ne.s32.totalorder %s139, %s142
      %p148 = scmp.eq.s32.totalorder %s19, 0
      %p149 = por %p147, %p148
      %p150 = scmp.ne.s32.totalorder %s139, %s142
      %p151 = scmp.eq.s32.totalorder %s24, 1
      %p152 = por %p150, %p151
      %p153 = scmp.ne.s32.totalorder %s142, %s143
      %p154 = scmp.eq.s32.totalorder %s24, 0
      %p155 = por %p153, %p154
      %p156 = scmp.ne.s32.totalorder %s142, %s143
      %p157 = scmp.eq.s32.totalorder %s25, 1
      %p158 = por %p156, %p157
      %p160 = scmp.ne.s32.totalorder %s143, %s159
      %p161 = scmp.eq.s32.totalorder %s25, 0
      %p162 = por %p160, %p161
      %p163 = scmp.le.s32.totalorder 1, %s19
      %p164 = scmp.lt.s32.totalorder %s19, 3
      %p165 = pnand %p163, %p164
      %p166 = pneg %p165
      // Predicated region
      $region9: #{discriminator_forward.1} parent=5 // pred_check
        _
      $region10: #{discriminator_forward.1} parent=5 // pred_check_branch
        %168 = sbr.rel (%p165) target = $region12
      $region11: #{discriminator_forward.1} parent=5 // pred_region
        %s169 = ssub.s32 %s19, 1
        // Predicated region
        $region13: #{discriminator_forward.1} parent=11 // pred_check
          %p170 = pneg %p66
        $region14: #{discriminator_forward.1} parent=11 // pred_check_branch
          %172 = sbr.rel (%p170) target = $region16
        $region15: #{discriminator_forward.1} parent=11 // pred_region
          %174 = vsyncadd [#allocation6], 0
          %s175 = sshll.u32 %s1, 4
          %s176 = int_to_ptr.hbm [resolvable:$true] %s175
          %s177 = sshll.u32 [#allocation5], 4
          %s178 = int_to_ptr.vmem [resolvable:$true] %s177
          %183 = dma.hbm_to_vmem [thread:$0]  %s176, 4096, %s178, [#allocation6], 128, 128, 8
        $region16: #{discriminator_forward.1} parent=11 // pred_fallthru
          _
        // Predicated region
        $region17: #{discriminator_forward.1} parent=11 // pred_check
          %p184 = pneg %p87
        $region18: #{discriminator_forward.1} parent=11 // pred_check_branch
          %186 = sbr.rel (%p184) target = $region20
        $region19: #{discriminator_forward.1} parent=11 // pred_region
          %188 = vsyncadd [#allocation6], 0
          %s190 = sshll.u32 %s2, 4
          %s191 = int_to_ptr.hbm [resolvable:$true] %s190
          %s192 = sshll.u32 [#allocation7], 4
          %s193 = int_to_ptr.vmem [resolvable:$true] %s192
          %195 = dma.hbm_to_vmem [thread:$0]  %s191, 32, %s193, [#allocation6]
        $region20: #{discriminator_forward.1} parent=11 // pred_fallthru
          _
        // Predicated region
        $region21: #{discriminator_forward.1} parent=11 // pred_check
          %p196 = pneg %p108
        $region22: #{discriminator_forward.1} parent=11 // pred_check_branch
          %198 = sbr.rel (%p196) target = $region24
        $region23: #{discriminator_forward.1} parent=11 // pred_region
          %200 = vsyncadd [#allocation9], 0
          %s201 = sshll.u32 %s3, 4
          %s202 = int_to_ptr.hbm [resolvable:$true] %s201
          %s203 = sshll.u32 [#allocation8], 4
          %s204 = int_to_ptr.vmem [resolvable:$true] %s203
          %209 = dma.hbm_to_vmem [thread:$0]  %s202, 2048, %s204, [#allocation9], 64, 64, 4
        $region24: #{discriminator_forward.1} parent=11 // pred_fallthru
          _
        // Predicated region
        $region25: #{discriminator_forward.1} parent=11 // pred_check
          %p210 = pneg %p129
        $region26: #{discriminator_forward.1} parent=11 // pred_check_branch
          %212 = sbr.rel (%p210) target = $region28
        $region27: #{discriminator_forward.1} parent=11 // pred_region
          _
        $region28: #{discriminator_forward.1} parent=11 // pred_fallthru
          _
      $region12: #{discriminator_forward.1} parent=5 // pred_fallthru
        _
      %p213 = scmp.lt.s32.totalorder %s19, 2
      // Predicated region
      $region29: #{discriminator_forward.1} parent=5 // pred_check
        %p214 = pneg %p213
      $region30: #{discriminator_forward.1} parent=5 // pred_check_branch
        %216 = sbr.rel (%p214) target = $region32
      $region31: #{discriminator_forward.1} parent=5 // pred_region
        // Predicated region
        $region33: #{discriminator_forward.1} parent=31 // pred_check
          %p217 = pneg %p39
        $region34: #{discriminator_forward.1} parent=31 // pred_check_branch
          %219 = sbr.rel (%p217) target = $region36
        $region35: #{discriminator_forward.1} parent=31 // pred_region
          %s220 = sand.u32 %s29, 1
          %s221 = scalar_lea.sflag [#allocation3], %s220
          %s222 = sand.u32 %s29, 1
          %s223 = smul.addr %s222, 256
          %s224 = scalar_lea.vmem [#allocation2], %s223
          %s225 = smul.u32 16, %s19
          %227 = vsyncadd %s221, 0
          %s228 = smul.addr %s225, 2
          %s229 = smul.addr %s228, 8
          %s230 = scalar_lea.hbm %s0, %s229
          %s231 = sshll.u32 %s230, 4
          %s232 = int_to_ptr.hbm [resolvable:$true] %s231
          %s233 = sshll.u32 %s224, 4
          %s234 = int_to_ptr.vmem [resolvable:$true] %s233
          %239 = dma.hbm_to_vmem [thread:$0]  %s232, 4096, %s234, %s221, 256, 256, 16
        $region36: #{discriminator_forward.1} parent=31 // pred_fallthru
          _
      $region32: #{discriminator_forward.1} parent=5 // pred_fallthru
        _
      %p240 = scmp.le.s32.totalorder 1, %s19
      %p241 = scmp.lt.s32.totalorder %s19, 3
      %p242 = pnand %p240, %p241
      %p243 = pneg %p242
      // Predicated region
      $region37: #{discriminator_forward.1} parent=5 // pred_check
        _
      $region38: #{discriminator_forward.1} parent=5 // pred_check_branch
        %245 = sbr.rel (%p242) target = $region40
      $region39: #{discriminator_forward.1} parent=5 // pred_region
        %s246 = ssub.s32 %s19, 1
        %s247 = sand.u32 %s32, 1
        %s248 = scalar_lea.sflag [#allocation3], %s247
        %s249 = sand.u32 %s32, 1
        %s250 = smul.addr %s249, 256
        %s251 = scalar_lea.vmem [#allocation2], %s250
        // Predicated region
        $region41: #{discriminator_forward.1} parent=39 // pred_check
          %p252 = pneg %p45
        $region42: #{discriminator_forward.1} parent=39 // pred_check_branch
          %254 = sbr.rel (%p252) target = $region44
        $region43: #{discriminator_forward.1} parent=39 // pred_region
          %256 = dma.done %s248, 4096
        $region44: #{discriminator_forward.1} parent=39 // pred_fallthru
          _
        // Predicated region
        $region45: #{discriminator_forward.1} parent=39 // pred_check
          %p257 = pneg %p66
        $region46: #{discriminator_forward.1} parent=39 // pred_check_branch
          %259 = sbr.rel (%p257) target = $region48
        $region47: #{discriminator_forward.1} parent=39 // pred_region
          %261 = dma.done [#allocation6], 4096
        $region48: #{discriminator_forward.1} parent=39 // pred_fallthru
          _
        // Predicated region
        $region49: #{discriminator_forward.1} parent=39 // pred_check
          %p262 = pneg %p87
        $region50: #{discriminator_forward.1} parent=39 // pred_check_branch
          %264 = sbr.rel (%p262) target = $region52
        $region51: #{discriminator_forward.1} parent=39 // pred_region
          %266 = dma.done [#allocation6], 32
        $region52: #{discriminator_forward.1} parent=39 // pred_fallthru
          _
        // Predicated region
        $region53: #{discriminator_forward.1} parent=39 // pred_check
          %p267 = pneg %p108
        $region54: #{discriminator_forward.1} parent=39 // pred_check_branch
          %269 = sbr.rel (%p267) target = $region56
        $region55: #{discriminator_forward.1} parent=39 // pred_region
          %271 = dma.done [#allocation9], 2048
        $region56: #{discriminator_forward.1} parent=39 // pred_fallthru
          _
        %s272 = sand.u32 %s32, 1
        %s273 = scalar_lea.sflag [#allocation3], %s272
        %s274 = sand.u32 %s32, 1
        %s275 = smul.addr %s274, 256
        %s276 = scalar_lea.vmem [#allocation2], %s275
        %p277 = pneg %p45
        %p278 = pneg %p42
        %p279 = pneg %p66
        %p280 = pneg %p63
        %p281 = pneg %p87
        %p282 = pneg %p84
        %p283 = pneg %p108
        %p284 = pneg %p105
        %p285 = pneg %p129
        %p286 = pneg %p126
        %p287 = pneg %p155
        %p288 = pneg %p152
        %s289 = sand.u32 %s142, 1
        %s290 = scalar_lea.sflag [#allocation4], %s289
        %s291 = sand.u32 %s142, 1
        %s292 = smul.addr %s291, 64
        %s293 = scalar_lea.vmem [#allocation10], %s292
        %s294 = smul.u32 16, %s24
        %s295 = smul.u32 16, %s24
        %v296 = vld [vmem:[%s251] sm:$0xff]
        %v297 = vld [vmem:[%s251 + $0x8] sm:$0xff]
        %v298 = vld [vmem:[%s251 + $0x10] sm:$0xff]
        %v299 = vld [vmem:[%s251 + $0x18] sm:$0xff]
        %v300 = vld [vmem:[%s251 + $0x20] sm:$0xff]
        %v301 = vld [vmem:[%s251 + $0x28] sm:$0xff]
        %v302 = vld [vmem:[%s251 + $0x30] sm:$0xff]
        %v303 = vld [vmem:[%s251 + $0x38] sm:$0xff]
        %v304 = vld [vmem:[%s251 + $0x40] sm:$0xff]
        %v305 = vld [vmem:[%s251 + $0x48] sm:$0xff]
        %v306 = vld [vmem:[%s251 + $0x50] sm:$0xff]
        %v307 = vld [vmem:[%s251 + $0x58] sm:$0xff]
        %v308 = vld [vmem:[%s251 + $0x60] sm:$0xff]
        %v309 = vld [vmem:[%s251 + $0x68] sm:$0xff]
        %v310 = vld [vmem:[%s251 + $0x70] sm:$0xff]
        %v311 = vld [vmem:[%s251 + $0x78] sm:$0xff]
        %v312 = vld [vmem:[%s251 + $0x80] sm:$0xff]
        %v313 = vld [vmem:[%s251 + $0x88] sm:$0xff]
        %v314 = vld [vmem:[%s251 + $0x90] sm:$0xff]
        %v315 = vld [vmem:[%s251 + $0x98] sm:$0xff]
        %v316 = vld [vmem:[%s251 + $0xa0] sm:$0xff]
        %v317 = vld [vmem:[%s251 + $0xa8] sm:$0xff]
        %v318 = vld [vmem:[%s251 + $0xb0] sm:$0xff]
        %v319 = vld [vmem:[%s251 + $0xb8] sm:$0xff]
        %v320 = vld [vmem:[%s251 + $0xc0] sm:$0xff]
        %v321 = vld [vmem:[%s251 + $0xc8] sm:$0xff]
        %v322 = vld [vmem:[%s251 + $0xd0] sm:$0xff]
        %v323 = vld [vmem:[%s251 + $0xd8] sm:$0xff]
        %v324 = vld [vmem:[%s251 + $0xe0] sm:$0xff]
        %v325 = vld [vmem:[%s251 + $0xe8] sm:$0xff]
        %v326 = vld [vmem:[%s251 + $0xf0] sm:$0xff]
        %v327 = vld [vmem:[%s251 + $0xf8] sm:$0xff]
        %v328 = vpack.c.bf16 %v298, %v296
        %v329 = vpack.c.bf16 %v299, %v297
        %v330 = vpack.c.bf16 %v302, %v300
        %v331 = vpack.c.bf16 %v303, %v301
        %v332 = vpack.c.bf16 %v306, %v304
        %v333 = vpack.c.bf16 %v307, %v305
        %v334 = vpack.c.bf16 %v310, %v308
        %v335 = vpack.c.bf16 %v311, %v309
        %v336 = vpack.c.bf16 %v314, %v312
        %v337 = vpack.c.bf16 %v315, %v313
        %v338 = vpack.c.bf16 %v318, %v316
        %v339 = vpack.c.bf16 %v319, %v317
        %v340 = vpack.c.bf16 %v322, %v320
        %v341 = vpack.c.bf16 %v323, %v321
        %v342 = vpack.c.bf16 %v326, %v324
        %v343 = vpack.c.bf16 %v327, %v325
        %v344 = vld [vmem:[#allocation5] sm:$0xff]
        %v345 = vld [vmem:[#allocation5 + $0x8] sm:$0xff]
        %v346 = vld [vmem:[#allocation5 + $0x10] sm:$0xff]
        %v347 = vld [vmem:[#allocation5 + $0x18] sm:$0xff]
        %v348 = vld [vmem:[#allocation5 + $0x20] sm:$0xff]
        %v349 = vld [vmem:[#allocation5 + $0x28] sm:$0xff]
        %v350 = vld [vmem:[#allocation5 + $0x30] sm:$0xff]
        %v351 = vld [vmem:[#allocation5 + $0x38] sm:$0xff]
        %v352 = vld [vmem:[#allocation5 + $0x40] sm:$0xff]
        %v353 = vld [vmem:[#allocation5 + $0x48] sm:$0xff]
        %v354 = vld [vmem:[#allocation5 + $0x50] sm:$0xff]
        %v355 = vld [vmem:[#allocation5 + $0x58] sm:$0xff]
        %v356 = vld [vmem:[#allocation5 + $0x60] sm:$0xff]
        %v357 = vld [vmem:[#allocation5 + $0x68] sm:$0xff]
        %v358 = vld [vmem:[#allocation5 + $0x70] sm:$0xff]
        %v359 = vld [vmem:[#allocation5 + $0x78] sm:$0xff]
        %v360 = vld [vmem:[#allocation5 + $0x80] sm:$0xff]
        %v361 = vld [vmem:[#allocation5 + $0x88] sm:$0xff]
        %v362 = vld [vmem:[#allocation5 + $0x90] sm:$0xff]
        %v363 = vld [vmem:[#allocation5 + $0x98] sm:$0xff]
        %v364 = vld [vmem:[#allocation5 + $0xa0] sm:$0xff]
        %v365 = vld [vmem:[#allocation5 + $0xa8] sm:$0xff]
        %v366 = vld [vmem:[#allocation5 + $0xb0] sm:$0xff]
        %v367 = vld [vmem:[#allocation5 + $0xb8] sm:$0xff]
        %v368 = vld [vmem:[#allocation5 + $0xc0] sm:$0xff]
        %v369 = vld [vmem:[#allocation5 + $0xc8] sm:$0xff]
        %v370 = vld [vmem:[#allocation5 + $0xd0] sm:$0xff]
        %v371 = vld [vmem:[#allocation5 + $0xd8] sm:$0xff]
        %v372 = vld [vmem:[#allocation5 + $0xe0] sm:$0xff]
        %v373 = vld [vmem:[#allocation5 + $0xe8] sm:$0xff]
        %v374 = vld [vmem:[#allocation5 + $0xf0] sm:$0xff]
        %v375 = vld [vmem:[#allocation5 + $0xf8] sm:$0xff]
        %v376 = vld [vmem:[#allocation7] sm:$0x3]
        %v378 = vperm.slane %v376, 0
        %v379 = vperm.slane %v376, 1
        %v414 = vunpack.c.l.b16 %v344
        %v415 = vunpack.c.h.b16 %v344
        %v416 = vunpack.c.l.b16 %v345
        %v417 = vunpack.c.h.b16 %v345
        %v418 = vunpack.c.l.b16 %v346
        %v419 = vunpack.c.h.b16 %v346
        %v420 = vunpack.c.l.b16 %v347
        %v421 = vunpack.c.h.b16 %v347
        %v422 = vunpack.c.l.b16 %v348
        %v423 = vunpack.c.h.b16 %v348
        %v424 = vunpack.c.l.b16 %v349
        %v425 = vunpack.c.h.b16 %v349
        %v426 = vunpack.c.l.b16 %v350
        %v427 = vunpack.c.h.b16 %v350
        %v428 = vunpack.c.l.b16 %v351
        %v429 = vunpack.c.h.b16 %v351
        %v430 = vunpack.c.l.b16 %v352
        %v431 = vunpack.c.h.b16 %v352
        %v432 = vunpack.c.l.b16 %v353
        %v433 = vunpack.c.h.b16 %v353
        %v434 = vunpack.c.l.b16 %v354
        %v435 = vunpack.c.h.b16 %v354
        %v436 = vunpack.c.l.b16 %v355
        %v437 = vunpack.c.h.b16 %v355
        %v438 = vunpack.c.l.b16 %v356
        %v439 = vunpack.c.h.b16 %v356
        %v440 = vunpack.c.l.b16 %v357
        %v441 = vunpack.c.h.b16 %v357
        %v442 = vunpack.c.l.b16 %v358
        %v443 = vunpack.c.h.b16 %v358
        %v444 = vunpack.c.l.b16 %v359
        %v445 = vunpack.c.h.b16 %v359
        %v446 = vunpack.c.l.b16 %v360
        %v447 = vunpack.c.h.b16 %v360
        %v448 = vunpack.c.l.b16 %v361
        %v449 = vunpack.c.h.b16 %v361
        %v450 = vunpack.c.l.b16 %v362
        %v451 = vunpack.c.h.b16 %v362
        %v452 = vunpack.c.l.b16 %v363
        %v453 = vunpack.c.h.b16 %v363
        %v454 = vunpack.c.l.b16 %v364
        %v455 = vunpack.c.h.b16 %v364
        %v456 = vunpack.c.l.b16 %v365
        %v457 = vunpack.c.h.b16 %v365
        %v458 = vunpack.c.l.b16 %v366
        %v459 = vunpack.c.h.b16 %v366
        %v460 = vunpack.c.l.b16 %v367
        %v461 = vunpack.c.h.b16 %v367
        %v462 = vunpack.c.l.b16 %v368
        %v463 = vunpack.c.h.b16 %v368
        %v464 = vunpack.c.l.b16 %v369
        %v465 = vunpack.c.h.b16 %v369
        %v466 = vunpack.c.l.b16 %v370
        %v467 = vunpack.c.h.b16 %v370
        %v468 = vunpack.c.l.b16 %v371
        %v469 = vunpack.c.h.b16 %v371
        %v470 = vunpack.c.l.b16 %v372
        %v471 = vunpack.c.h.b16 %v372
        %v472 = vunpack.c.l.b16 %v373
        %v473 = vunpack.c.h.b16 %v373
        %v474 = vunpack.c.l.b16 %v374
        %v475 = vunpack.c.h.b16 %v374
        %v476 = vunpack.c.l.b16 %v375
        %v477 = vunpack.c.h.b16 %v375
        %v478 = vpack.c.b16 %v416, %v414
        %v479 = vpack.c.b16 %v417, %v415
        %v480 = vpack.c.b16 %v420, %v418
        %v481 = vpack.c.b16 %v421, %v419
        %v482 = vpack.c.b16 %v424, %v422
        %v483 = vpack.c.b16 %v425, %v423
        %v484 = vpack.c.b16 %v428, %v426
        %v485 = vpack.c.b16 %v429, %v427
        %v486 = vpack.c.b16 %v432, %v430
        %v487 = vpack.c.b16 %v433, %v431
        %v488 = vpack.c.b16 %v436, %v434
        %v489 = vpack.c.b16 %v437, %v435
        %v490 = vpack.c.b16 %v440, %v438
        %v491 = vpack.c.b16 %v441, %v439
        %v492 = vpack.c.b16 %v444, %v442
        %v493 = vpack.c.b16 %v445, %v443
        %v494 = vpack.c.b16 %v448, %v446
        %v495 = vpack.c.b16 %v449, %v447
        %v496 = vpack.c.b16 %v452, %v450
        %v497 = vpack.c.b16 %v453, %v451
        %v498 = vpack.c.b16 %v456, %v454
        %v499 = vpack.c.b16 %v457, %v455
        %v500 = vpack.c.b16 %v460, %v458
        %v501 = vpack.c.b16 %v461, %v459
        %v502 = vpack.c.b16 %v464, %v462
        %v503 = vpack.c.b16 %v465, %v463
        %v504 = vpack.c.b16 %v468, %v466
        %v505 = vpack.c.b16 %v469, %v467
        %v506 = vpack.c.b16 %v472, %v470
        %v507 = vpack.c.b16 %v473, %v471
        %v508 = vpack.c.b16 %v476, %v474
        %v509 = vpack.c.b16 %v477, %v475
        %542 = vmatpush.bf16.msra.mxu0 %v492
        %543 = vmatpush.bf16.msra.mxu0 %v490
        %544 = vmatpush.bf16.msra.mxu0 %v488
        %545 = vmatpush.bf16.msra.mxu0 %v486
        %546 = vmatpush.bf16.msra.mxu0 %v484
        %547 = vmatpush.bf16.msra.mxu0 %v482
        %548 = vmatpush.bf16.msra.mxu0 %v480
        %549 = vmatpush.bf16.msra.mxu0 %v478
        %550 = vmatmul.bf16.gmra.mxu0 %v328
        %v551 = vpop.f32.mrf.mxu0
        %v552 = vadd.f32 %v378, %v551
        %v553 = vpop.f32.mrf.mxu0
        %v554 = vadd.f32 %v378, %v553
        %555 = vmatmul.bf16.gmra.mxu0 %v330
        %v556 = vpop.f32.mrf.mxu0
        %v557 = vadd.f32 %v378, %v556
        %v558 = vpop.f32.mrf.mxu0
        %v559 = vadd.f32 %v378, %v558
        %560 = vmatmul.bf16.gmra.mxu0 %v332
        %v561 = vpop.f32.mrf.mxu0
        %v562 = vadd.f32 %v378, %v561
        %v563 = vpop.f32.mrf.mxu0
        %v564 = vadd.f32 %v378, %v563
        %565 = vmatmul.bf16.gmra.mxu0 %v334
        %v566 = vpop.f32.mrf.mxu0
        %v567 = vadd.f32 %v378, %v566
        %v568 = vpop.f32.mrf.mxu0
        %v569 = vadd.f32 %v378, %v568
        %570 = vmatmul.bf16.gmra.mxu0 %v336
        %v571 = vpop.f32.mrf.mxu0
        %v572 = vadd.f32 %v378, %v571
        %v573 = vpop.f32.mrf.mxu0
        %v574 = vadd.f32 %v378, %v573
        %575 = vmatmul.bf16.gmra.mxu0 %v338
        %v576 = vpop.f32.mrf.mxu0
        %v577 = vadd.f32 %v378, %v576
        %v578 = vpop.f32.mrf.mxu0
        %v579 = vadd.f32 %v378, %v578
        %580 = vmatmul.bf16.gmra.mxu0 %v340
        %v581 = vpop.f32.mrf.mxu0
        %v582 = vadd.f32 %v378, %v581
        %v583 = vpop.f32.mrf.mxu0
        %v584 = vadd.f32 %v378, %v583
        %585 = vmatmul.bf16.gmra.mxu0 %v342
        %v586 = vpop.f32.mrf.mxu0
        %v587 = vadd.f32 %v378, %v586
        %v588 = vpop.f32.mrf.mxu0
        %v589 = vadd.f32 %v378, %v588
        %590 = vdwg.mxu0
        %591 = vmatpush.bf16.msra.mxu0 %v508
        %592 = vmatpush.bf16.msra.mxu0 %v506
        %593 = vmatpush.bf16.msra.mxu0 %v504
        %594 = vmatpush.bf16.msra.mxu0 %v502
        %595 = vmatpush.bf16.msra.mxu0 %v500
        %596 = vmatpush.bf16.msra.mxu0 %v498
        %597 = vmatpush.bf16.msra.mxu0 %v496
        %598 = vmatpush.bf16.msra.mxu0 %v494
        %599 = vmatmul.bf16.gmra.mxu0 %v329
        %v600 = vpop.f32.mrf.mxu0
        %v601 = vadd.f32 %v552, %v600
        %v602 = vpop.f32.mrf.mxu0
        %v603 = vadd.f32 %v554, %v602
        %604 = vmatmul.bf16.gmra.mxu0 %v331
        %v605 = vpop.f32.mrf.mxu0
        %v606 = vadd.f32 %v557, %v605
        %v607 = vpop.f32.mrf.mxu0
        %v608 = vadd.f32 %v559, %v607
        %609 = vmatmul.bf16.gmra.mxu0 %v333
        %v610 = vpop.f32.mrf.mxu0
        %v611 = vadd.f32 %v562, %v610
        %v612 = vpop.f32.mrf.mxu0
        %v613 = vadd.f32 %v564, %v612
        %614 = vmatmul.bf16.gmra.mxu0 %v335
        %v615 = vpop.f32.mrf.mxu0
        %v616 = vadd.f32 %v567, %v615
        %v617 = vpop.f32.mrf.mxu0
        %v618 = vadd.f32 %v569, %v617
        %619 = vmatmul.bf16.gmra.mxu0 %v337
        %v620 = vpop.f32.mrf.mxu0
        %v621 = vadd.f32 %v572, %v620
        %v622 = vpop.f32.mrf.mxu0
        %v623 = vadd.f32 %v574, %v622
        %624 = vmatmul.bf16.gmra.mxu0 %v339
        %v625 = vpop.f32.mrf.mxu0
        %v626 = vadd.f32 %v577, %v625
        %v627 = vpop.f32.mrf.mxu0
        %v628 = vadd.f32 %v579, %v627
        %629 = vmatmul.bf16.gmra.mxu0 %v341
        %v630 = vpop.f32.mrf.mxu0
        %v631 = vadd.f32 %v582, %v630
        %v632 = vpop.f32.mrf.mxu0
        %v633 = vadd.f32 %v584, %v632
        %634 = vmatmul.bf16.gmra.mxu0 %v343
        %v635 = vpop.f32.mrf.mxu0
        %v636 = vadd.f32 %v587, %v635
        %v637 = vpop.f32.mrf.mxu0
        %v638 = vadd.f32 %v589, %v637
        %639 = vdwg.mxu0
        %640 = vmatpush.bf16.msra.mxu0 %v493
        %641 = vmatpush.bf16.msra.mxu0 %v491
        %642 = vmatpush.bf16.msra.mxu0 %v489
        %643 = vmatpush.bf16.msra.mxu0 %v487
        %644 = vmatpush.bf16.msra.mxu0 %v485
        %645 = vmatpush.bf16.msra.mxu0 %v483
        %646 = vmatpush.bf16.msra.mxu0 %v481
        %647 = vmatpush.bf16.msra.mxu0 %v479
        %648 = vmatmul.bf16.gmra.mxu0 %v328
        %v649 = vpop.f32.mrf.mxu0
        %v650 = vadd.f32 %v379, %v649
        %v651 = vpop.f32.mrf.mxu0
        %v652 = vadd.f32 %v379, %v651
        %653 = vmatmul.bf16.gmra.mxu0 %v330
        %v654 = vpop.f32.mrf.mxu0
        %v655 = vadd.f32 %v379, %v654
        %v656 = vpop.f32.mrf.mxu0
        %v657 = vadd.f32 %v379, %v656
        %658 = vmatmul.bf16.gmra.mxu0 %v332
        %v659 = vpop.f32.mrf.mxu0
        %v660 = vadd.f32 %v379, %v659
        %v661 = vpop.f32.mrf.mxu0
        %v662 = vadd.f32 %v379, %v661
        %663 = vmatmul.bf16.gmra.mxu0 %v334
        %v664 = vpop.f32.mrf.mxu0
        %v665 = vadd.f32 %v379, %v664
        %v666 = vpop.f32.mrf.mxu0
        %v667 = vadd.f32 %v379, %v666
        %668 = vmatmul.bf16.gmra.mxu0 %v336
        %v669 = vpop.f32.mrf.mxu0
        %v670 = vadd.f32 %v379, %v669
        %v671 = vpop.f32.mrf.mxu0
        %v672 = vadd.f32 %v379, %v671
        %673 = vmatmul.bf16.gmra.mxu0 %v338
        %v674 = vpop.f32.mrf.mxu0
        %v675 = vadd.f32 %v379, %v674
        %v676 = vpop.f32.mrf.mxu0
        %v677 = vadd.f32 %v379, %v676
        %678 = vmatmul.bf16.gmra.mxu0 %v340
        %v679 = vpop.f32.mrf.mxu0
        %v680 = vadd.f32 %v379, %v679
        %v681 = vpop.f32.mrf.mxu0
        %v682 = vadd.f32 %v379, %v681
        %683 = vmatmul.bf16.gmra.mxu0 %v342
        %v684 = vpop.f32.mrf.mxu0
        %v685 = vadd.f32 %v379, %v684
        %v686 = vpop.f32.mrf.mxu0
        %v687 = vadd.f32 %v379, %v686
        %688 = vdwg.mxu0
        %689 = vmatpush.bf16.msra.mxu0 %v509
        %690 = vmatpush.bf16.msra.mxu0 %v507
        %691 = vmatpush.bf16.msra.mxu0 %v505
        %692 = vmatpush.bf16.msra.mxu0 %v503
        %693 = vmatpush.bf16.msra.mxu0 %v501
        %694 = vmatpush.bf16.msra.mxu0 %v499
        %695 = vmatpush.bf16.msra.mxu0 %v497
        %696 = vmatpush.bf16.msra.mxu0 %v495
        %697 = vmatmul.bf16.gmra.mxu0 %v329
        %v698 = vpop.f32.mrf.mxu0
        %v699 = vadd.f32 %v650, %v698
        %v700 = vpop.f32.mrf.mxu0
        %v701 = vadd.f32 %v652, %v700
        %702 = vmatmul.bf16.gmra.mxu0 %v331
        %v703 = vpop.f32.mrf.mxu0
        %v704 = vadd.f32 %v655, %v703
        %v705 = vpop.f32.mrf.mxu0
        %v706 = vadd.f32 %v657, %v705
        %707 = vmatmul.bf16.gmra.mxu0 %v333
        %v708 = vpop.f32.mrf.mxu0
        %v709 = vadd.f32 %v660, %v708
        %v710 = vpop.f32.mrf.mxu0
        %v711 = vadd.f32 %v662, %v710
        %712 = vmatmul.bf16.gmra.mxu0 %v335
        %v713 = vpop.f32.mrf.mxu0
        %v714 = vadd.f32 %v665, %v713
        %v715 = vpop.f32.mrf.mxu0
        %v716 = vadd.f32 %v667, %v715
        %717 = vmatmul.bf16.gmra.mxu0 %v337
        %v718 = vpop.f32.mrf.mxu0
        %v719 = vadd.f32 %v670, %v718
        %v720 = vpop.f32.mrf.mxu0
        %v721 = vadd.f32 %v672, %v720
        %722 = vmatmul.bf16.gmra.mxu0 %v339
        %v723 = vpop.f32.mrf.mxu0
        %v724 = vadd.f32 %v675, %v723
        %v725 = vpop.f32.mrf.mxu0
        %v726 = vadd.f32 %v677, %v725
        %727 = vmatmul.bf16.gmra.mxu0 %v341
        %v728 = vpop.f32.mrf.mxu0
        %v729 = vadd.f32 %v680, %v728
        %v730 = vpop.f32.mrf.mxu0
        %v731 = vadd.f32 %v682, %v730
        %732 = vmatmul.bf16.gmra.mxu0 %v343
        %v733 = vpop.f32.mrf.mxu0
        %v734 = vadd.f32 %v685, %v733
        %v735 = vpop.f32.mrf.mxu0
        %v736 = vadd.f32 %v687, %v735
        %737 = vdwg.mxu0
        %v738 = vxor.u32 %v601, 2147483648
        %v739 = vxor.u32 %v699, 2147483648
        %v740 = vxor.u32 %v603, 2147483648
        %v741 = vxor.u32 %v701, 2147483648
        %v742 = vxor.u32 %v606, 2147483648
        %v743 = vxor.u32 %v704, 2147483648
        %v744 = vxor.u32 %v608, 2147483648
        %v745 = vxor.u32 %v706, 2147483648
        %v746 = vxor.u32 %v611, 2147483648
        %v747 = vxor.u32 %v709, 2147483648
        %v748 = vxor.u32 %v613, 2147483648
        %v749 = vxor.u32 %v711, 2147483648
        %v750 = vxor.u32 %v616, 2147483648
        %v751 = vxor.u32 %v714, 2147483648
        %v752 = vxor.u32 %v618, 2147483648
        %v753 = vxor.u32 %v716, 2147483648
        %v754 = vxor.u32 %v621, 2147483648
        %v755 = vxor.u32 %v719, 2147483648
        %v756 = vxor.u32 %v623, 2147483648
        %v757 = vxor.u32 %v721, 2147483648
        %v758 = vxor.u32 %v626, 2147483648
        %v759 = vxor.u32 %v724, 2147483648
        %v760 = vxor.u32 %v628, 2147483648
        %v761 = vxor.u32 %v726, 2147483648
        %v762 = vxor.u32 %v631, 2147483648
        %v763 = vxor.u32 %v729, 2147483648
        %v764 = vxor.u32 %v633, 2147483648
        %v765 = vxor.u32 %v731, 2147483648
        %v766 = vxor.u32 %v636, 2147483648
        %v767 = vxor.u32 %v734, 2147483648
        %v768 = vxor.u32 %v638, 2147483648
        %v769 = vxor.u32 %v736, 2147483648
        %v770 = vmul.f32 %v738, 1.442695
        %v771 = vpow.pop %v770
        %v772 = vmul.f32 %v739, 1.442695
        %v773 = vpow.pop %v772
        %v774 = vmul.f32 %v740, 1.442695
        %v775 = vpow.pop %v774
        %v776 = vmul.f32 %v741, 1.442695
        %v777 = vpow.pop %v776
        %v778 = vmul.f32 %v742, 1.442695
        %v779 = vpow.pop %v778
        %v780 = vmul.f32 %v743, 1.442695
        %v781 = vpow.pop %v780
        %v782 = vmul.f32 %v744, 1.442695
        %v783 = vpow.pop %v782
        %v784 = vmul.f32 %v745, 1.442695
        %v785 = vpow.pop %v784
        %v786 = vmul.f32 %v746, 1.442695
        %v787 = vpow.pop %v786
        %v788 = vmul.f32 %v747, 1.442695
        %v789 = vpow.pop %v788
        %v790 = vmul.f32 %v748, 1.442695
        %v791 = vpow.pop %v790
        %v792 = vmul.f32 %v749, 1.442695
        %v793 = vpow.pop %v792
        %v794 = vmul.f32 %v750, 1.442695
        %v795 = vpow.pop %v794
        %v796 = vmul.f32 %v751, 1.442695
        %v797 = vpow.pop %v796
        %v798 = vmul.f32 %v752, 1.442695
        %v799 = vpow.pop %v798
        %v800 = vmul.f32 %v753, 1.442695
        %v801 = vpow.pop %v800
        %v802 = vmul.f32 %v754, 1.442695
        %v803 = vpow.pop %v802
        %v804 = vmul.f32 %v755, 1.442695
        %v805 = vpow.pop %v804
        %v806 = vmul.f32 %v756, 1.442695
        %v807 = vpow.pop %v806
        %v808 = vmul.f32 %v757, 1.442695
        %v809 = vpow.pop %v808
        %v810 = vmul.f32 %v758, 1.442695
        %v811 = vpow.pop %v810
        %v812 = vmul.f32 %v759, 1.442695
        %v813 = vpow.pop %v812
        %v814 = vmul.f32 %v760, 1.442695
        %v815 = vpow.pop %v814
        %v816 = vmul.f32 %v761, 1.442695
        %v817 = vpow.pop %v816
        %v818 = vmul.f32 %v762, 1.442695
        %v819 = vpow.pop %v818
        %v820 = vmul.f32 %v763, 1.442695
        %v821 = vpow.pop %v820
        %v822 = vmul.f32 %v764, 1.442695
        %v823 = vpow.pop %v822
        %v824 = vmul.f32 %v765, 1.442695
        %v825 = vpow.pop %v824
        %v826 = vmul.f32 %v766, 1.442695
        %v827 = vpow.pop %v826
        %v828 = vmul.f32 %v767, 1.442695
        %v829 = vpow.pop %v828
        %v830 = vmul.f32 %v768, 1.442695
        %v831 = vpow.pop %v830
        %v832 = vmul.f32 %v769, 1.442695
        %v833 = vpow.pop %v832
        %v834 = vadd.f32 %v771, 1.0
        %v835 = vadd.f32 %v773, 1.0
        %v836 = vadd.f32 %v775, 1.0
        %v837 = vadd.f32 %v777, 1.0
        %v838 = vadd.f32 %v779, 1.0
        %v839 = vadd.f32 %v781, 1.0
        %v840 = vadd.f32 %v783, 1.0
        %v841 = vadd.f32 %v785, 1.0
        %v842 = vadd.f32 %v787, 1.0
        %v843 = vadd.f32 %v789, 1.0
        %v844 = vadd.f32 %v791, 1.0
        %v845 = vadd.f32 %v793, 1.0
        %v846 = vadd.f32 %v795, 1.0
        %v847 = vadd.f32 %v797, 1.0
        %v848 = vadd.f32 %v799, 1.0
        %v849 = vadd.f32 %v801, 1.0
        %v850 = vadd.f32 %v803, 1.0
        %v851 = vadd.f32 %v805, 1.0
        %v852 = vadd.f32 %v807, 1.0
        %v853 = vadd.f32 %v809, 1.0
        %v854 = vadd.f32 %v811, 1.0
        %v855 = vadd.f32 %v813, 1.0
        %v856 = vadd.f32 %v815, 1.0
        %v857 = vadd.f32 %v817, 1.0
        %v858 = vadd.f32 %v819, 1.0
        %v859 = vadd.f32 %v821, 1.0
        %v860 = vadd.f32 %v823, 1.0
        %v861 = vadd.f32 %v825, 1.0
        %v862 = vadd.f32 %v827, 1.0
        %v863 = vadd.f32 %v829, 1.0
        %v864 = vadd.f32 %v831, 1.0
        %v865 = vadd.f32 %v833, 1.0
        %v866 = vrcp.pop %v834
        %v867 = vmul.f32 %v834, %v866
        %v868 = vsub.f32 1.0, %v867
        %v869 = vmul.f32 %v866, %v868
        %v870 = vadd.f32 %v866, %v869
        %vm871 = vweird.f32 %v834
        %vm872 = vweird.f32 %v866
        %vm873 = vmor %vm871, %vm872
        %v874 = vsel %vm873, %v866, %v870
        %v875 = vand.u32 2147483647, %v834
        %vm876 = vcmp.eq.f32.partialorder %v875, 8.507059e+37
        %v877 = vand.u32 %v834, 2147483648
        %v878 = vor.u32 1.1754944e-38, %v877
        %v879 = vsel %vm876, %v878, %v874
        %v880 = vmul.f32 1.0, %v879
        %v881 = vrcp.pop %v835
        %v882 = vmul.f32 %v835, %v881
        %v883 = vsub.f32 1.0, %v882
        %v884 = vmul.f32 %v881, %v883
        %v885 = vadd.f32 %v881, %v884
        %vm886 = vweird.f32 %v835
        %vm887 = vweird.f32 %v881
        %vm888 = vmor %vm886, %vm887
        %v889 = vsel %vm888, %v881, %v885
        %v890 = vand.u32 2147483647, %v835
        %vm891 = vcmp.eq.f32.partialorder %v890, 8.507059e+37
        %v892 = vand.u32 %v835, 2147483648
        %v893 = vor.u32 1.1754944e-38, %v892
        %v894 = vsel %vm891, %v893, %v889
        %v895 = vmul.f32 1.0, %v894
        %v896 = vrcp.pop %v836
        %v897 = vmul.f32 %v836, %v896
        %v898 = vsub.f32 1.0, %v897
        %v899 = vmul.f32 %v896, %v898
        %v900 = vadd.f32 %v896, %v899
        %vm901 = vweird.f32 %v836
        %vm902 = vweird.f32 %v896
        %vm903 = vmor %vm901, %vm902
        %v904 = vsel %vm903, %v896, %v900
        %v905 = vand.u32 2147483647, %v836
        %vm906 = vcmp.eq.f32.partialorder %v905, 8.507059e+37
        %v907 = vand.u32 %v836, 2147483648
        %v908 = vor.u32 1.1754944e-38, %v907
        %v909 = vsel %vm906, %v908, %v904
        %v910 = vmul.f32 1.0, %v909
        %v911 = vrcp.pop %v837
        %v912 = vmul.f32 %v837, %v911
        %v913 = vsub.f32 1.0, %v912
        %v914 = vmul.f32 %v911, %v913
        %v915 = vadd.f32 %v911, %v914
        %vm916 = vweird.f32 %v837
        %vm917 = vweird.f32 %v911
        %vm918 = vmor %vm916, %vm917
        %v919 = vsel %vm918, %v911, %v915
        %v920 = vand.u32 2147483647, %v837
        %vm921 = vcmp.eq.f32.partialorder %v920, 8.507059e+37
        %v922 = vand.u32 %v837, 2147483648
        %v923 = vor.u32 1.1754944e-38, %v922
        %v924 = vsel %vm921, %v923, %v919
        %v925 = vmul.f32 1.0, %v924
        %v926 = vrcp.pop %v838
        %v927 = vmul.f32 %v838, %v926
        %v928 = vsub.f32 1.0, %v927
        %v929 = vmul.f32 %v926, %v928
        %v930 = vadd.f32 %v926, %v929
        %vm931 = vweird.f32 %v838
        %vm932 = vweird.f32 %v926
        %vm933 = vmor %vm931, %vm932
        %v934 = vsel %vm933, %v926, %v930
        %v935 = vand.u32 2147483647, %v838
        %vm936 = vcmp.eq.f32.partialorder %v935, 8.507059e+37
        %v937 = vand.u32 %v838, 2147483648
        %v938 = vor.u32 1.1754944e-38, %v937
        %v939 = vsel %vm936, %v938, %v934
        %v940 = vmul.f32 1.0, %v939
        %v941 = vrcp.pop %v839
        %v942 = vmul.f32 %v839, %v941
        %v943 = vsub.f32 1.0, %v942
        %v944 = vmul.f32 %v941, %v943
        %v945 = vadd.f32 %v941, %v944
        %vm946 = vweird.f32 %v839
        %vm947 = vweird.f32 %v941
        %vm948 = vmor %vm946, %vm947
        %v949 = vsel %vm948, %v941, %v945
        %v950 = vand.u32 2147483647, %v839
        %vm951 = vcmp.eq.f32.partialorder %v950, 8.507059e+37
        %v952 = vand.u32 %v839, 2147483648
        %v953 = vor.u32 1.1754944e-38, %v952
        %v954 = vsel %vm951, %v953, %v949
        %v955 = vmul.f32 1.0, %v954
        %v956 = vrcp.pop %v840
        %v957 = vmul.f32 %v840, %v956
        %v958 = vsub.f32 1.0, %v957
        %v959 = vmul.f32 %v956, %v958
        %v960 = vadd.f32 %v956, %v959
        %vm961 = vweird.f32 %v840
        %vm962 = vweird.f32 %v956
        %vm963 = vmor %vm961, %vm962
        %v964 = vsel %vm963, %v956, %v960
        %v965 = vand.u32 2147483647, %v840
        %vm966 = vcmp.eq.f32.partialorder %v965, 8.507059e+37
        %v967 = vand.u32 %v840, 2147483648
        %v968 = vor.u32 1.1754944e-38, %v967
        %v969 = vsel %vm966, %v968, %v964
        %v970 = vmul.f32 1.0, %v969
        %v971 = vrcp.pop %v841
        %v972 = vmul.f32 %v841, %v971
        %v973 = vsub.f32 1.0, %v972
        %v974 = vmul.f32 %v971, %v973
        %v975 = vadd.f32 %v971, %v974
        %vm976 = vweird.f32 %v841
        %vm977 = vweird.f32 %v971
        %vm978 = vmor %vm976, %vm977
        %v979 = vsel %vm978, %v971, %v975
        %v980 = vand.u32 2147483647, %v841
        %vm981 = vcmp.eq.f32.partialorder %v980, 8.507059e+37
        %v982 = vand.u32 %v841, 2147483648
        %v983 = vor.u32 1.1754944e-38, %v982
        %v984 = vsel %vm981, %v983, %v979
        %v985 = vmul.f32 1.0, %v984
        %v986 = vrcp.pop %v842
        %v987 = vmul.f32 %v842, %v986
        %v988 = vsub.f32 1.0, %v987
        %v989 = vmul.f32 %v986, %v988
        %v990 = vadd.f32 %v986, %v989
        %vm991 = vweird.f32 %v842
        %vm992 = vweird.f32 %v986
        %vm993 = vmor %vm991, %vm992
        %v994 = vsel %vm993, %v986, %v990
        %v995 = vand.u32 2147483647, %v842
        %vm996 = vcmp.eq.f32.partialorder %v995, 8.507059e+37
        %v997 = vand.u32 %v842, 2147483648
        %v998 = vor.u32 1.1754944e-38, %v997
        %v999 = vsel %vm996, %v998, %v994
        %v1000 = vmul.f32 1.0, %v999
        %v1001 = vrcp.pop %v843
        %v1002 = vmul.f32 %v843, %v1001
        %v1003 = vsub.f32 1.0, %v1002
        %v1004 = vmul.f32 %v1001, %v1003
        %v1005 = vadd.f32 %v1001, %v1004
        %vm1006 = vweird.f32 %v843
        %vm1007 = vweird.f32 %v1001
        %vm1008 = vmor %vm1006, %vm1007
        %v1009 = vsel %vm1008, %v1001, %v1005
        %v1010 = vand.u32 2147483647, %v843
        %vm1011 = vcmp.eq.f32.partialorder %v1010, 8.507059e+37
        %v1012 = vand.u32 %v843, 2147483648
        %v1013 = vor.u32 1.1754944e-38, %v1012
        %v1014 = vsel %vm1011, %v1013, %v1009
        %v1015 = vmul.f32 1.0, %v1014
        %v1016 = vrcp.pop %v844
        %v1017 = vmul.f32 %v844, %v1016
        %v1018 = vsub.f32 1.0, %v1017
        %v1019 = vmul.f32 %v1016, %v1018
        %v1020 = vadd.f32 %v1016, %v1019
        %vm1021 = vweird.f32 %v844
        %vm1022 = vweird.f32 %v1016
        %vm1023 = vmor %vm1021, %vm1022
        %v1024 = vsel %vm1023, %v1016, %v1020
        %v1025 = vand.u32 2147483647, %v844
        %vm1026 = vcmp.eq.f32.partialorder %v1025, 8.507059e+37
        %v1027 = vand.u32 %v844, 2147483648
        %v1028 = vor.u32 1.1754944e-38, %v1027
        %v1029 = vsel %vm1026, %v1028, %v1024
        %v1030 = vmul.f32 1.0, %v1029
        %v1031 = vrcp.pop %v845
        %v1032 = vmul.f32 %v845, %v1031
        %v1033 = vsub.f32 1.0, %v1032
        %v1034 = vmul.f32 %v1031, %v1033
        %v1035 = vadd.f32 %v1031, %v1034
        %vm1036 = vweird.f32 %v845
        %vm1037 = vweird.f32 %v1031
        %vm1038 = vmor %vm1036, %vm1037
        %v1039 = vsel %vm1038, %v1031, %v1035
        %v1040 = vand.u32 2147483647, %v845
        %vm1041 = vcmp.eq.f32.partialorder %v1040, 8.507059e+37
        %v1042 = vand.u32 %v845, 2147483648
        %v1043 = vor.u32 1.1754944e-38, %v1042
        %v1044 = vsel %vm1041, %v1043, %v1039
        %v1045 = vmul.f32 1.0, %v1044
        %v1046 = vrcp.pop %v846
        %v1047 = vmul.f32 %v846, %v1046
        %v1048 = vsub.f32 1.0, %v1047
        %v1049 = vmul.f32 %v1046, %v1048
        %v1050 = vadd.f32 %v1046, %v1049
        %vm1051 = vweird.f32 %v846
        %vm1052 = vweird.f32 %v1046
        %vm1053 = vmor %vm1051, %vm1052
        %v1054 = vsel %vm1053, %v1046, %v1050
        %v1055 = vand.u32 2147483647, %v846
        %vm1056 = vcmp.eq.f32.partialorder %v1055, 8.507059e+37
        %v1057 = vand.u32 %v846, 2147483648
        %v1058 = vor.u32 1.1754944e-38, %v1057
        %v1059 = vsel %vm1056, %v1058, %v1054
        %v1060 = vmul.f32 1.0, %v1059
        %v1061 = vrcp.pop %v847
        %v1062 = vmul.f32 %v847, %v1061
        %v1063 = vsub.f32 1.0, %v1062
        %v1064 = vmul.f32 %v1061, %v1063
        %v1065 = vadd.f32 %v1061, %v1064
        %vm1066 = vweird.f32 %v847
        %vm1067 = vweird.f32 %v1061
        %vm1068 = vmor %vm1066, %vm1067
        %v1069 = vsel %vm1068, %v1061, %v1065
        %v1070 = vand.u32 2147483647, %v847
        %vm1071 = vcmp.eq.f32.partialorder %v1070, 8.507059e+37
        %v1072 = vand.u32 %v847, 2147483648
        %v1073 = vor.u32 1.1754944e-38, %v1072
        %v1074 = vsel %vm1071, %v1073, %v1069
        %v1075 = vmul.f32 1.0, %v1074
        %v1076 = vrcp.pop %v848
        %v1077 = vmul.f32 %v848, %v1076
        %v1078 = vsub.f32 1.0, %v1077
        %v1079 = vmul.f32 %v1076, %v1078
        %v1080 = vadd.f32 %v1076, %v1079
        %vm1081 = vweird.f32 %v848
        %vm1082 = vweird.f32 %v1076
        %vm1083 = vmor %vm1081, %vm1082
        %v1084 = vsel %vm1083, %v1076, %v1080
        %v1085 = vand.u32 2147483647, %v848
        %vm1086 = vcmp.eq.f32.partialorder %v1085, 8.507059e+37
        %v1087 = vand.u32 %v848, 2147483648
        %v1088 = vor.u32 1.1754944e-38, %v1087
        %v1089 = vsel %vm1086, %v1088, %v1084
        %v1090 = vmul.f32 1.0, %v1089
        %v1091 = vrcp.pop %v849
        %v1092 = vmul.f32 %v849, %v1091
        %v1093 = vsub.f32 1.0, %v1092
        %v1094 = vmul.f32 %v1091, %v1093
        %v1095 = vadd.f32 %v1091, %v1094
        %vm1096 = vweird.f32 %v849
        %vm1097 = vweird.f32 %v1091
        %vm1098 = vmor %vm1096, %vm1097
        %v1099 = vsel %vm1098, %v1091, %v1095
        %v1100 = vand.u32 2147483647, %v849
        %vm1101 = vcmp.eq.f32.partialorder %v1100, 8.507059e+37
        %v1102 = vand.u32 %v849, 2147483648
        %v1103 = vor.u32 1.1754944e-38, %v1102
        %v1104 = vsel %vm1101, %v1103, %v1099
        %v1105 = vmul.f32 1.0, %v1104
        %v1106 = vrcp.pop %v850
        %v1107 = vmul.f32 %v850, %v1106
        %v1108 = vsub.f32 1.0, %v1107
        %v1109 = vmul.f32 %v1106, %v1108
        %v1110 = vadd.f32 %v1106, %v1109
        %vm1111 = vweird.f32 %v850
        %vm1112 = vweird.f32 %v1106
        %vm1113 = vmor %vm1111, %vm1112
        %v1114 = vsel %vm1113, %v1106, %v1110
        %v1115 = vand.u32 2147483647, %v850
        %vm1116 = vcmp.eq.f32.partialorder %v1115, 8.507059e+37
        %v1117 = vand.u32 %v850, 2147483648
        %v1118 = vor.u32 1.1754944e-38, %v1117
        %v1119 = vsel %vm1116, %v1118, %v1114
        %v1120 = vmul.f32 1.0, %v1119
        %v1121 = vrcp.pop %v851
        %v1122 = vmul.f32 %v851, %v1121
        %v1123 = vsub.f32 1.0, %v1122
        %v1124 = vmul.f32 %v1121, %v1123
        %v1125 = vadd.f32 %v1121, %v1124
        %vm1126 = vweird.f32 %v851
        %vm1127 = vweird.f32 %v1121
        %vm1128 = vmor %vm1126, %vm1127
        %v1129 = vsel %vm1128, %v1121, %v1125
        %v1130 = vand.u32 2147483647, %v851
        %vm1131 = vcmp.eq.f32.partialorder %v1130, 8.507059e+37
        %v1132 = vand.u32 %v851, 2147483648
        %v1133 = vor.u32 1.1754944e-38, %v1132
        %v1134 = vsel %vm1131, %v1133, %v1129
        %v1135 = vmul.f32 1.0, %v1134
        %v1136 = vrcp.pop %v852
        %v1137 = vmul.f32 %v852, %v1136
        %v1138 = vsub.f32 1.0, %v1137
        %v1139 = vmul.f32 %v1136, %v1138
        %v1140 = vadd.f32 %v1136, %v1139
        %vm1141 = vweird.f32 %v852
        %vm1142 = vweird.f32 %v1136
        %vm1143 = vmor %vm1141, %vm1142
        %v1144 = vsel %vm1143, %v1136, %v1140
        %v1145 = vand.u32 2147483647, %v852
        %vm1146 = vcmp.eq.f32.partialorder %v1145, 8.507059e+37
        %v1147 = vand.u32 %v852, 2147483648
        %v1148 = vor.u32 1.1754944e-38, %v1147
        %v1149 = vsel %vm1146, %v1148, %v1144
        %v1150 = vmul.f32 1.0, %v1149
        %v1151 = vrcp.pop %v853
        %v1152 = vmul.f32 %v853, %v1151
        %v1153 = vsub.f32 1.0, %v1152
        %v1154 = vmul.f32 %v1151, %v1153
        %v1155 = vadd.f32 %v1151, %v1154
        %vm1156 = vweird.f32 %v853
        %vm1157 = vweird.f32 %v1151
        %vm1158 = vmor %vm1156, %vm1157
        %v1159 = vsel %vm1158, %v1151, %v1155
        %v1160 = vand.u32 2147483647, %v853
        %vm1161 = vcmp.eq.f32.partialorder %v1160, 8.507059e+37
        %v1162 = vand.u32 %v853, 2147483648
        %v1163 = vor.u32 1.1754944e-38, %v1162
        %v1164 = vsel %vm1161, %v1163, %v1159
        %v1165 = vmul.f32 1.0, %v1164
        %v1166 = vrcp.pop %v854
        %v1167 = vmul.f32 %v854, %v1166
        %v1168 = vsub.f32 1.0, %v1167
        %v1169 = vmul.f32 %v1166, %v1168
        %v1170 = vadd.f32 %v1166, %v1169
        %vm1171 = vweird.f32 %v854
        %vm1172 = vweird.f32 %v1166
        %vm1173 = vmor %vm1171, %vm1172
        %v1174 = vsel %vm1173, %v1166, %v1170
        %v1175 = vand.u32 2147483647, %v854
        %vm1176 = vcmp.eq.f32.partialorder %v1175, 8.507059e+37
        %v1177 = vand.u32 %v854, 2147483648
        %v1178 = vor.u32 1.1754944e-38, %v1177
        %v1179 = vsel %vm1176, %v1178, %v1174
        %v1180 = vmul.f32 1.0, %v1179
        %v1181 = vrcp.pop %v855
        %v1182 = vmul.f32 %v855, %v1181
        %v1183 = vsub.f32 1.0, %v1182
        %v1184 = vmul.f32 %v1181, %v1183
        %v1185 = vadd.f32 %v1181, %v1184
        %vm1186 = vweird.f32 %v855
        %vm1187 = vweird.f32 %v1181
        %vm1188 = vmor %vm1186, %vm1187
        %v1189 = vsel %vm1188, %v1181, %v1185
        %v1190 = vand.u32 2147483647, %v855
        %vm1191 = vcmp.eq.f32.partialorder %v1190, 8.507059e+37
        %v1192 = vand.u32 %v855, 2147483648
        %v1193 = vor.u32 1.1754944e-38, %v1192
        %v1194 = vsel %vm1191, %v1193, %v1189
        %v1195 = vmul.f32 1.0, %v1194
        %v1196 = vrcp.pop %v856
        %v1197 = vmul.f32 %v856, %v1196
        %v1198 = vsub.f32 1.0, %v1197
        %v1199 = vmul.f32 %v1196, %v1198
        %v1200 = vadd.f32 %v1196, %v1199
        %vm1201 = vweird.f32 %v856
        %vm1202 = vweird.f32 %v1196
        %vm1203 = vmor %vm1201, %vm1202
        %v1204 = vsel %vm1203, %v1196, %v1200
        %v1205 = vand.u32 2147483647, %v856
        %vm1206 = vcmp.eq.f32.partialorder %v1205, 8.507059e+37
        %v1207 = vand.u32 %v856, 2147483648
        %v1208 = vor.u32 1.1754944e-38, %v1207
        %v1209 = vsel %vm1206, %v1208, %v1204
        %v1210 = vmul.f32 1.0, %v1209
        %v1211 = vrcp.pop %v857
        %v1212 = vmul.f32 %v857, %v1211
        %v1213 = vsub.f32 1.0, %v1212
        %v1214 = vmul.f32 %v1211, %v1213
        %v1215 = vadd.f32 %v1211, %v1214
        %vm1216 = vweird.f32 %v857
        %vm1217 = vweird.f32 %v1211
        %vm1218 = vmor %vm1216, %vm1217
        %v1219 = vsel %vm1218, %v1211, %v1215
        %v1220 = vand.u32 2147483647, %v857
        %vm1221 = vcmp.eq.f32.partialorder %v1220, 8.507059e+37
        %v1222 = vand.u32 %v857, 2147483648
        %v1223 = vor.u32 1.1754944e-38, %v1222
        %v1224 = vsel %vm1221, %v1223, %v1219
        %v1225 = vmul.f32 1.0, %v1224
        %v1226 = vrcp.pop %v858
        %v1227 = vmul.f32 %v858, %v1226
        %v1228 = vsub.f32 1.0, %v1227
        %v1229 = vmul.f32 %v1226, %v1228
        %v1230 = vadd.f32 %v1226, %v1229
        %vm1231 = vweird.f32 %v858
        %vm1232 = vweird.f32 %v1226
        %vm1233 = vmor %vm1231, %vm1232
        %v1234 = vsel %vm1233, %v1226, %v1230
        %v1235 = vand.u32 2147483647, %v858
        %vm1236 = vcmp.eq.f32.partialorder %v1235, 8.507059e+37
        %v1237 = vand.u32 %v858, 2147483648
        %v1238 = vor.u32 1.1754944e-38, %v1237
        %v1239 = vsel %vm1236, %v1238, %v1234
        %v1240 = vmul.f32 1.0, %v1239
        %v1241 = vrcp.pop %v859
        %v1242 = vmul.f32 %v859, %v1241
        %v1243 = vsub.f32 1.0, %v1242
        %v1244 = vmul.f32 %v1241, %v1243
        %v1245 = vadd.f32 %v1241, %v1244
        %vm1246 = vweird.f32 %v859
        %vm1247 = vweird.f32 %v1241
        %vm1248 = vmor %vm1246, %vm1247
        %v1249 = vsel %vm1248, %v1241, %v1245
        %v1250 = vand.u32 2147483647, %v859
        %vm1251 = vcmp.eq.f32.partialorder %v1250, 8.507059e+37
        %v1252 = vand.u32 %v859, 2147483648
        %v1253 = vor.u32 1.1754944e-38, %v1252
        %v1254 = vsel %vm1251, %v1253, %v1249
        %v1255 = vmul.f32 1.0, %v1254
        %v1256 = vrcp.pop %v860
        %v1257 = vmul.f32 %v860, %v1256
        %v1258 = vsub.f32 1.0, %v1257
        %v1259 = vmul.f32 %v1256, %v1258
        %v1260 = vadd.f32 %v1256, %v1259
        %vm1261 = vweird.f32 %v860
        %vm1262 = vweird.f32 %v1256
        %vm1263 = vmor %vm1261, %vm1262
        %v1264 = vsel %vm1263, %v1256, %v1260
        %v1265 = vand.u32 2147483647, %v860
        %vm1266 = vcmp.eq.f32.partialorder %v1265, 8.507059e+37
        %v1267 = vand.u32 %v860, 2147483648
        %v1268 = vor.u32 1.1754944e-38, %v1267
        %v1269 = vsel %vm1266, %v1268, %v1264
        %v1270 = vmul.f32 1.0, %v1269
        %v1271 = vrcp.pop %v861
        %v1272 = vmul.f32 %v861, %v1271
        %v1273 = vsub.f32 1.0, %v1272
        %v1274 = vmul.f32 %v1271, %v1273
        %v1275 = vadd.f32 %v1271, %v1274
        %vm1276 = vweird.f32 %v861
        %vm1277 = vweird.f32 %v1271
        %vm1278 = vmor %vm1276, %vm1277
        %v1279 = vsel %vm1278, %v1271, %v1275
        %v1280 = vand.u32 2147483647, %v861
        %vm1281 = vcmp.eq.f32.partialorder %v1280, 8.507059e+37
        %v1282 = vand.u32 %v861, 2147483648
        %v1283 = vor.u32 1.1754944e-38, %v1282
        %v1284 = vsel %vm1281, %v1283, %v1279
        %v1285 = vmul.f32 1.0, %v1284
        %v1286 = vrcp.pop %v862
        %v1287 = vmul.f32 %v862, %v1286
        %v1288 = vsub.f32 1.0, %v1287
        %v1289 = vmul.f32 %v1286, %v1288
        %v1290 = vadd.f32 %v1286, %v1289
        %vm1291 = vweird.f32 %v862
        %vm1292 = vweird.f32 %v1286
        %vm1293 = vmor %vm1291, %vm1292
        %v1294 = vsel %vm1293, %v1286, %v1290
        %v1295 = vand.u32 2147483647, %v862
        %vm1296 = vcmp.eq.f32.partialorder %v1295, 8.507059e+37
        %v1297 = vand.u32 %v862, 2147483648
        %v1298 = vor.u32 1.1754944e-38, %v1297
        %v1299 = vsel %vm1296, %v1298, %v1294
        %v1300 = vmul.f32 1.0, %v1299
        %v1301 = vrcp.pop %v863
        %v1302 = vmul.f32 %v863, %v1301
        %v1303 = vsub.f32 1.0, %v1302
        %v1304 = vmul.f32 %v1301, %v1303
        %v1305 = vadd.f32 %v1301, %v1304
        %vm1306 = vweird.f32 %v863
        %vm1307 = vweird.f32 %v1301
        %vm1308 = vmor %vm1306, %vm1307
        %v1309 = vsel %vm1308, %v1301, %v1305
        %v1310 = vand.u32 2147483647, %v863
        %vm1311 = vcmp.eq.f32.partialorder %v1310, 8.507059e+37
        %v1312 = vand.u32 %v863, 2147483648
        %v1313 = vor.u32 1.1754944e-38, %v1312
        %v1314 = vsel %vm1311, %v1313, %v1309
        %v1315 = vmul.f32 1.0, %v1314
        %v1316 = vrcp.pop %v864
        %v1317 = vmul.f32 %v864, %v1316
        %v1318 = vsub.f32 1.0, %v1317
        %v1319 = vmul.f32 %v1316, %v1318
        %v1320 = vadd.f32 %v1316, %v1319
        %vm1321 = vweird.f32 %v864
        %vm1322 = vweird.f32 %v1316
        %vm1323 = vmor %vm1321, %vm1322
        %v1324 = vsel %vm1323, %v1316, %v1320
        %v1325 = vand.u32 2147483647, %v864
        %vm1326 = vcmp.eq.f32.partialorder %v1325, 8.507059e+37
        %v1327 = vand.u32 %v864, 2147483648
        %v1328 = vor.u32 1.1754944e-38, %v1327
        %v1329 = vsel %vm1326, %v1328, %v1324
        %v1330 = vmul.f32 1.0, %v1329
        %v1331 = vrcp.pop %v865
        %v1332 = vmul.f32 %v865, %v1331
        %v1333 = vsub.f32 1.0, %v1332
        %v1334 = vmul.f32 %v1331, %v1333
        %v1335 = vadd.f32 %v1331, %v1334
        %vm1336 = vweird.f32 %v865
        %vm1337 = vweird.f32 %v1331
        %vm1338 = vmor %vm1336, %vm1337
        %v1339 = vsel %vm1338, %v1331, %v1335
        %v1340 = vand.u32 2147483647, %v865
        %vm1341 = vcmp.eq.f32.partialorder %v1340, 8.507059e+37
        %v1342 = vand.u32 %v865, 2147483648
        %v1343 = vor.u32 1.1754944e-38, %v1342
        %v1344 = vsel %vm1341, %v1343, %v1339
        %v1345 = vmul.f32 1.0, %v1344
        %v1346 = vpack.c.bf16 %v910, %v880
        %v1347 = vpack.c.bf16 %v925, %v895
        %v1348 = vpack.c.bf16 %v970, %v940
        %v1349 = vpack.c.bf16 %v985, %v955
        %v1350 = vpack.c.bf16 %v1030, %v1000
        %v1351 = vpack.c.bf16 %v1045, %v1015
        %v1352 = vpack.c.bf16 %v1090, %v1060
        %v1353 = vpack.c.bf16 %v1105, %v1075
        %v1354 = vpack.c.bf16 %v1150, %v1120
        %v1355 = vpack.c.bf16 %v1165, %v1135
        %v1356 = vpack.c.bf16 %v1210, %v1180
        %v1357 = vpack.c.bf16 %v1225, %v1195
        %v1358 = vpack.c.bf16 %v1270, %v1240
        %v1359 = vpack.c.bf16 %v1285, %v1255
        %v1360 = vpack.c.bf16 %v1330, %v1300
        %v1361 = vpack.c.bf16 %v1345, %v1315
        %v1362 = vld [vmem:[#allocation8] sm:$0xf]
        %v1363 = vld [vmem:[#allocation8 + $0x4] sm:$0xf]
        %v1364 = vld [vmem:[#allocation8 + $0x8] sm:$0xf]
        %v1365 = vld [vmem:[#allocation8 + $0xc] sm:$0xf]
        %v1366 = vld [vmem:[#allocation8 + $0x10] sm:$0xf]
        %v1367 = vld [vmem:[#allocation8 + $0x14] sm:$0xf]
        %v1368 = vld [vmem:[#allocation8 + $0x18] sm:$0xf]
        %v1369 = vld [vmem:[#allocation8 + $0x1c] sm:$0xf]
        %v1370 = vld [vmem:[#allocation8 + $0x20] sm:$0xf]
        %v1371 = vld [vmem:[#allocation8 + $0x24] sm:$0xf]
        %v1372 = vld [vmem:[#allocation8 + $0x28] sm:$0xf]
        %v1373 = vld [vmem:[#allocation8 + $0x2c] sm:$0xf]
        %v1374 = vld [vmem:[#allocation8 + $0x30] sm:$0xf]
        %v1375 = vld [vmem:[#allocation8 + $0x34] sm:$0xf]
        %v1376 = vld [vmem:[#allocation8 + $0x38] sm:$0xf]
        %v1377 = vld [vmem:[#allocation8 + $0x3c] sm:$0xf]
        %v1378 = vld [vmem:[#allocation8 + $0x40] sm:$0xf]
        %v1379 = vld [vmem:[#allocation8 + $0x44] sm:$0xf]
        %v1380 = vld [vmem:[#allocation8 + $0x48] sm:$0xf]
        %v1381 = vld [vmem:[#allocation8 + $0x4c] sm:$0xf]
        %v1382 = vld [vmem:[#allocation8 + $0x50] sm:$0xf]
        %v1383 = vld [vmem:[#allocation8 + $0x54] sm:$0xf]
        %v1384 = vld [vmem:[#allocation8 + $0x58] sm:$0xf]
        %v1385 = vld [vmem:[#allocation8 + $0x5c] sm:$0xf]
        %v1386 = vld [vmem:[#allocation8 + $0x60] sm:$0xf]
        %v1387 = vld [vmem:[#allocation8 + $0x64] sm:$0xf]
        %v1388 = vld [vmem:[#allocation8 + $0x68] sm:$0xf]
        %v1389 = vld [vmem:[#allocation8 + $0x6c] sm:$0xf]
        %v1390 = vld [vmem:[#allocation8 + $0x70] sm:$0xf]
        %v1391 = vld [vmem:[#allocation8 + $0x74] sm:$0xf]
        %v1392 = vld [vmem:[#allocation8 + $0x78] sm:$0xf]
        %v1393 = vld [vmem:[#allocation8 + $0x7c] sm:$0xf]
        %v1394 = vld [vmem:[%s4] sm:$0x1]
        %v1396 = vperm.slane %v1394, 0
        %v1430 = vunpack.c.l.b16 %v1362
        %v1431 = vunpack.c.l.b16 %v1363
        %v1432 = vunpack.c.l.b16 %v1364
        %v1433 = vunpack.c.l.b16 %v1365
        %v1434 = vunpack.c.l.b16 %v1366
        %v1435 = vunpack.c.l.b16 %v1367
        %v1436 = vunpack.c.l.b16 %v1368
        %v1437 = vunpack.c.l.b16 %v1369
        %v1438 = vunpack.c.l.b16 %v1370
        %v1439 = vunpack.c.l.b16 %v1371
        %v1440 = vunpack.c.l.b16 %v1372
        %v1441 = vunpack.c.l.b16 %v1373
        %v1442 = vunpack.c.l.b16 %v1374
        %v1443 = vunpack.c.l.b16 %v1375
        %v1444 = vunpack.c.l.b16 %v1376
        %v1445 = vunpack.c.l.b16 %v1377
        %v1446 = vunpack.c.l.b16 %v1378
        %v1447 = vunpack.c.l.b16 %v1379
        %v1448 = vunpack.c.l.b16 %v1380
        %v1449 = vunpack.c.l.b16 %v1381
        %v1450 = vunpack.c.l.b16 %v1382
        %v1451 = vunpack.c.l.b16 %v1383
        %v1452 = vunpack.c.l.b16 %v1384
        %v1453 = vunpack.c.l.b16 %v1385
        %v1454 = vunpack.c.l.b16 %v1386
        %v1455 = vunpack.c.l.b16 %v1387
        %v1456 = vunpack.c.l.b16 %v1388
        %v1457 = vunpack.c.l.b16 %v1389
        %v1458 = vunpack.c.l.b16 %v1390
        %v1459 = vunpack.c.l.b16 %v1391
        %v1460 = vunpack.c.l.b16 %v1392
        %v1461 = vunpack.c.l.b16 %v1393
        %v1462 = vpack.c.b16 %v1431, %v1430
        %v1463 = vpack.c.b16 %v1433, %v1432
        %v1464 = vpack.c.b16 %v1435, %v1434
        %v1465 = vpack.c.b16 %v1437, %v1436
        %v1466 = vpack.c.b16 %v1439, %v1438
        %v1467 = vpack.c.b16 %v1441, %v1440
        %v1468 = vpack.c.b16 %v1443, %v1442
        %v1469 = vpack.c.b16 %v1445, %v1444
        %v1470 = vpack.c.b16 %v1447, %v1446
        %v1471 = vpack.c.b16 %v1449, %v1448
        %v1472 = vpack.c.b16 %v1451, %v1450
        %v1473 = vpack.c.b16 %v1453, %v1452
        %v1474 = vpack.c.b16 %v1455, %v1454
        %v1475 = vpack.c.b16 %v1457, %v1456
        %v1476 = vpack.c.b16 %v1459, %v1458
        %v1477 = vpack.c.b16 %v1461, %v1460
        %1494 = vmatpush.bf16.msra.mxu0 %v1469
        %1495 = vmatpush.bf16.msra.mxu0 %v1468
        %1496 = vmatpush.bf16.msra.mxu0 %v1467
        %1497 = vmatpush.bf16.msra.mxu0 %v1466
        %1498 = vmatpush.bf16.msra.mxu0 %v1465
        %1499 = vmatpush.bf16.msra.mxu0 %v1464
        %1500 = vmatpush.bf16.msra.mxu0 %v1463
        %1501 = vmatpush.bf16.msra.mxu0 %v1462
        %1502 = vmatmul.bf16.gmra.mxu0 %v1346
        %v1503 = vpop.f32.mrf.mxu0
        %v1504 = vadd.f32 %v1396, %v1503
        %v1505 = vpop.f32.mrf.mxu0
        %v1506 = vadd.f32 %v1396, %v1505
        %1507 = vmatmul.bf16.gmra.mxu0 %v1348
        %v1508 = vpop.f32.mrf.mxu0
        %v1509 = vadd.f32 %v1396, %v1508
        %v1510 = vpop.f32.mrf.mxu0
        %v1511 = vadd.f32 %v1396, %v1510
        %1512 = vmatmul.bf16.gmra.mxu0 %v1350
        %v1513 = vpop.f32.mrf.mxu0
        %v1514 = vadd.f32 %v1396, %v1513
        %v1515 = vpop.f32.mrf.mxu0
        %v1516 = vadd.f32 %v1396, %v1515
        %1517 = vmatmul.bf16.gmra.mxu0 %v1352
        %v1518 = vpop.f32.mrf.mxu0
        %v1519 = vadd.f32 %v1396, %v1518
        %v1520 = vpop.f32.mrf.mxu0
        %v1521 = vadd.f32 %v1396, %v1520
        %1522 = vmatmul.bf16.gmra.mxu0 %v1354
        %v1523 = vpop.f32.mrf.mxu0
        %v1524 = vadd.f32 %v1396, %v1523
        %v1525 = vpop.f32.mrf.mxu0
        %v1526 = vadd.f32 %v1396, %v1525
        %1527 = vmatmul.bf16.gmra.mxu0 %v1356
        %v1528 = vpop.f32.mrf.mxu0
        %v1529 = vadd.f32 %v1396, %v1528
        %v1530 = vpop.f32.mrf.mxu0
        %v1531 = vadd.f32 %v1396, %v1530
        %1532 = vmatmul.bf16.gmra.mxu0 %v1358
        %v1533 = vpop.f32.mrf.mxu0
        %v1534 = vadd.f32 %v1396, %v1533
        %v1535 = vpop.f32.mrf.mxu0
        %v1536 = vadd.f32 %v1396, %v1535
        %1537 = vmatmul.bf16.gmra.mxu0 %v1360
        %v1538 = vpop.f32.mrf.mxu0
        %v1539 = vadd.f32 %v1396, %v1538
        %v1540 = vpop.f32.mrf.mxu0
        %v1541 = vadd.f32 %v1396, %v1540
        %1542 = vdwg.mxu0
        %1543 = vmatpush.bf16.msra.mxu0 %v1477
        %1544 = vmatpush.bf16.msra.mxu0 %v1476
        %1545 = vmatpush.bf16.msra.mxu0 %v1475
        %1546 = vmatpush.bf16.msra.mxu0 %v1474
        %1547 = vmatpush.bf16.msra.mxu0 %v1473
        %1548 = vmatpush.bf16.msra.mxu0 %v1472
        %1549 = vmatpush.bf16.msra.mxu0 %v1471
        %1550 = vmatpush.bf16.msra.mxu0 %v1470
        %1551 = vmatmul.bf16.gmra.mxu0 %v1347
        %v1552 = vpop.f32.mrf.mxu0
        %v1553 = vadd.f32 %v1504, %v1552
        %v1554 = vpop.f32.mrf.mxu0
        %v1555 = vadd.f32 %v1506, %v1554
        %1556 = vmatmul.bf16.gmra.mxu0 %v1349
        %v1557 = vpop.f32.mrf.mxu0
        %v1558 = vadd.f32 %v1509, %v1557
        %v1559 = vpop.f32.mrf.mxu0
        %v1560 = vadd.f32 %v1511, %v1559
        %1561 = vmatmul.bf16.gmra.mxu0 %v1351
        %v1562 = vpop.f32.mrf.mxu0
        %v1563 = vadd.f32 %v1514, %v1562
        %v1564 = vpop.f32.mrf.mxu0
        %v1565 = vadd.f32 %v1516, %v1564
        %1566 = vmatmul.bf16.gmra.mxu0 %v1353
        %v1567 = vpop.f32.mrf.mxu0
        %v1568 = vadd.f32 %v1519, %v1567
        %v1569 = vpop.f32.mrf.mxu0
        %v1570 = vadd.f32 %v1521, %v1569
        %1571 = vmatmul.bf16.gmra.mxu0 %v1355
        %v1572 = vpop.f32.mrf.mxu0
        %v1573 = vadd.f32 %v1524, %v1572
        %v1574 = vpop.f32.mrf.mxu0
        %v1575 = vadd.f32 %v1526, %v1574
        %1576 = vmatmul.bf16.gmra.mxu0 %v1357
        %v1577 = vpop.f32.mrf.mxu0
        %v1578 = vadd.f32 %v1529, %v1577
        %v1579 = vpop.f32.mrf.mxu0
        %v1580 = vadd.f32 %v1531, %v1579
        %1581 = vmatmul.bf16.gmra.mxu0 %v1359
        %v1582 = vpop.f32.mrf.mxu0
        %v1583 = vadd.f32 %v1534, %v1582
        %v1584 = vpop.f32.mrf.mxu0
        %v1585 = vadd.f32 %v1536, %v1584
        %1586 = vmatmul.bf16.gmra.mxu0 %v1361
        %v1587 = vpop.f32.mrf.mxu0
        %v1588 = vadd.f32 %v1539, %v1587
        %v1589 = vpop.f32.mrf.mxu0
        %v1590 = vadd.f32 %v1541, %v1589
        %1591 = vdwg.mxu0
        %v1592 = vxor.u32 %v1553, 2147483648
        %v1593 = vxor.u32 %v1555, 2147483648
        %v1594 = vxor.u32 %v1558, 2147483648
        %v1595 = vxor.u32 %v1560, 2147483648
        %v1596 = vxor.u32 %v1563, 2147483648
        %v1597 = vxor.u32 %v1565, 2147483648
        %v1598 = vxor.u32 %v1568, 2147483648
        %v1599 = vxor.u32 %v1570, 2147483648
        %v1600 = vxor.u32 %v1573, 2147483648
        %v1601 = vxor.u32 %v1575, 2147483648
        %v1602 = vxor.u32 %v1578, 2147483648
        %v1603 = vxor.u32 %v1580, 2147483648
        %v1604 = vxor.u32 %v1583, 2147483648
        %v1605 = vxor.u32 %v1585, 2147483648
        %v1606 = vxor.u32 %v1588, 2147483648
        %v1607 = vxor.u32 %v1590, 2147483648
        %v1608 = vmul.f32 %v1592, 1.442695
        %v1609 = vpow.pop %v1608
        %v1610 = vmul.f32 %v1593, 1.442695
        %v1611 = vpow.pop %v1610
        %v1612 = vmul.f32 %v1594, 1.442695
        %v1613 = vpow.pop %v1612
        %v1614 = vmul.f32 %v1595, 1.442695
        %v1615 = vpow.pop %v1614
        %v1616 = vmul.f32 %v1596, 1.442695
        %v1617 = vpow.pop %v1616
        %v1618 = vmul.f32 %v1597, 1.442695
        %v1619 = vpow.pop %v1618
        %v1620 = vmul.f32 %v1598, 1.442695
        %v1621 = vpow.pop %v1620
        %v1622 = vmul.f32 %v1599, 1.442695
        %v1623 = vpow.pop %v1622
        %v1624 = vmul.f32 %v1600, 1.442695
        %v1625 = vpow.pop %v1624
        %v1626 = vmul.f32 %v1601, 1.442695
        %v1627 = vpow.pop %v1626
        %v1628 = vmul.f32 %v1602, 1.442695
        %v1629 = vpow.pop %v1628
        %v1630 = vmul.f32 %v1603, 1.442695
        %v1631 = vpow.pop %v1630
        %v1632 = vmul.f32 %v1604, 1.442695
        %v1633 = vpow.pop %v1632
        %v1634 = vmul.f32 %v1605, 1.442695
        %v1635 = vpow.pop %v1634
        %v1636 = vmul.f32 %v1606, 1.442695
        %v1637 = vpow.pop %v1636
        %v1638 = vmul.f32 %v1607, 1.442695
        %v1639 = vpow.pop %v1638
        %v1640 = vadd.f32 %v1609, 1.0
        %v1641 = vadd.f32 %v1611, 1.0
        %v1642 = vadd.f32 %v1613, 1.0
        %v1643 = vadd.f32 %v1615, 1.0
        %v1644 = vadd.f32 %v1617, 1.0
        %v1645 = vadd.f32 %v1619, 1.0
        %v1646 = vadd.f32 %v1621, 1.0
        %v1647 = vadd.f32 %v1623, 1.0
        %v1648 = vadd.f32 %v1625, 1.0
        %v1649 = vadd.f32 %v1627, 1.0
        %v1650 = vadd.f32 %v1629, 1.0
        %v1651 = vadd.f32 %v1631, 1.0
        %v1652 = vadd.f32 %v1633, 1.0
        %v1653 = vadd.f32 %v1635, 1.0
        %v1654 = vadd.f32 %v1637, 1.0
        %v1655 = vadd.f32 %v1639, 1.0
        %v1656 = vrcp.pop %v1640
        %v1657 = vmul.f32 %v1640, %v1656
        %v1658 = vsub.f32 1.0, %v1657
        %v1659 = vmul.f32 %v1656, %v1658
        %v1660 = vadd.f32 %v1656, %v1659
        %vm1661 = vweird.f32 %v1640
        %vm1662 = vweird.f32 %v1656
        %vm1663 = vmor %vm1661, %vm1662
        %v1664 = vsel %vm1663, %v1656, %v1660
        %v1665 = vand.u32 2147483647, %v1640
        %vm1666 = vcmp.eq.f32.partialorder %v1665, 8.507059e+37
        %v1667 = vand.u32 %v1640, 2147483648
        %v1668 = vor.u32 1.1754944e-38, %v1667
        %v1669 = vsel %vm1666, %v1668, %v1664
        %v1670 = vmul.f32 1.0, %v1669
        %v1671 = vrcp.pop %v1641
        %v1672 = vmul.f32 %v1641, %v1671
        %v1673 = vsub.f32 1.0, %v1672
        %v1674 = vmul.f32 %v1671, %v1673
        %v1675 = vadd.f32 %v1671, %v1674
        %vm1676 = vweird.f32 %v1641
        %vm1677 = vweird.f32 %v1671
        %vm1678 = vmor %vm1676, %vm1677
        %v1679 = vsel %vm1678, %v1671, %v1675
        %v1680 = vand.u32 2147483647, %v1641
        %vm1681 = vcmp.eq.f32.partialorder %v1680, 8.507059e+37
        %v1682 = vand.u32 %v1641, 2147483648
        %v1683 = vor.u32 1.1754944e-38, %v1682
        %v1684 = vsel %vm1681, %v1683, %v1679
        %v1685 = vmul.f32 1.0, %v1684
        %v1686 = vrcp.pop %v1642
        %v1687 = vmul.f32 %v1642, %v1686
        %v1688 = vsub.f32 1.0, %v1687
        %v1689 = vmul.f32 %v1686, %v1688
        %v1690 = vadd.f32 %v1686, %v1689
        %vm1691 = vweird.f32 %v1642
        %vm1692 = vweird.f32 %v1686
        %vm1693 = vmor %vm1691, %vm1692
        %v1694 = vsel %vm1693, %v1686, %v1690
        %v1695 = vand.u32 2147483647, %v1642
        %vm1696 = vcmp.eq.f32.partialorder %v1695, 8.507059e+37
        %v1697 = vand.u32 %v1642, 2147483648
        %v1698 = vor.u32 1.1754944e-38, %v1697
        %v1699 = vsel %vm1696, %v1698, %v1694
        %v1700 = vmul.f32 1.0, %v1699
        %v1701 = vrcp.pop %v1643
        %v1702 = vmul.f32 %v1643, %v1701
        %v1703 = vsub.f32 1.0, %v1702
        %v1704 = vmul.f32 %v1701, %v1703
        %v1705 = vadd.f32 %v1701, %v1704
        %vm1706 = vweird.f32 %v1643
        %vm1707 = vweird.f32 %v1701
        %vm1708 = vmor %vm1706, %vm1707
        %v1709 = vsel %vm1708, %v1701, %v1705
        %v1710 = vand.u32 2147483647, %v1643
        %vm1711 = vcmp.eq.f32.partialorder %v1710, 8.507059e+37
        %v1712 = vand.u32 %v1643, 2147483648
        %v1713 = vor.u32 1.1754944e-38, %v1712
        %v1714 = vsel %vm1711, %v1713, %v1709
        %v1715 = vmul.f32 1.0, %v1714
        %v1716 = vrcp.pop %v1644
        %v1717 = vmul.f32 %v1644, %v1716
        %v1718 = vsub.f32 1.0, %v1717
        %v1719 = vmul.f32 %v1716, %v1718
        %v1720 = vadd.f32 %v1716, %v1719
        %vm1721 = vweird.f32 %v1644
        %vm1722 = vweird.f32 %v1716
        %vm1723 = vmor %vm1721, %vm1722
        %v1724 = vsel %vm1723, %v1716, %v1720
        %v1725 = vand.u32 2147483647, %v1644
        %vm1726 = vcmp.eq.f32.partialorder %v1725, 8.507059e+37
        %v1727 = vand.u32 %v1644, 2147483648
        %v1728 = vor.u32 1.1754944e-38, %v1727
        %v1729 = vsel %vm1726, %v1728, %v1724
        %v1730 = vmul.f32 1.0, %v1729
        %v1731 = vrcp.pop %v1645
        %v1732 = vmul.f32 %v1645, %v1731
        %v1733 = vsub.f32 1.0, %v1732
        %v1734 = vmul.f32 %v1731, %v1733
        %v1735 = vadd.f32 %v1731, %v1734
        %vm1736 = vweird.f32 %v1645
        %vm1737 = vweird.f32 %v1731
        %vm1738 = vmor %vm1736, %vm1737
        %v1739 = vsel %vm1738, %v1731, %v1735
        %v1740 = vand.u32 2147483647, %v1645
        %vm1741 = vcmp.eq.f32.partialorder %v1740, 8.507059e+37
        %v1742 = vand.u32 %v1645, 2147483648
        %v1743 = vor.u32 1.1754944e-38, %v1742
        %v1744 = vsel %vm1741, %v1743, %v1739
        %v1745 = vmul.f32 1.0, %v1744
        %v1746 = vrcp.pop %v1646
        %v1747 = vmul.f32 %v1646, %v1746
        %v1748 = vsub.f32 1.0, %v1747
        %v1749 = vmul.f32 %v1746, %v1748
        %v1750 = vadd.f32 %v1746, %v1749
        %vm1751 = vweird.f32 %v1646
        %vm1752 = vweird.f32 %v1746
        %vm1753 = vmor %vm1751, %vm1752
        %v1754 = vsel %vm1753, %v1746, %v1750
        %v1755 = vand.u32 2147483647, %v1646
        %vm1756 = vcmp.eq.f32.partialorder %v1755, 8.507059e+37
        %v1757 = vand.u32 %v1646, 2147483648
        %v1758 = vor.u32 1.1754944e-38, %v1757
        %v1759 = vsel %vm1756, %v1758, %v1754
        %v1760 = vmul.f32 1.0, %v1759
        %v1761 = vrcp.pop %v1647
        %v1762 = vmul.f32 %v1647, %v1761
        %v1763 = vsub.f32 1.0, %v1762
        %v1764 = vmul.f32 %v1761, %v1763
        %v1765 = vadd.f32 %v1761, %v1764
        %vm1766 = vweird.f32 %v1647
        %vm1767 = vweird.f32 %v1761
        %vm1768 = vmor %vm1766, %vm1767
        %v1769 = vsel %vm1768, %v1761, %v1765
        %v1770 = vand.u32 2147483647, %v1647
        %vm1771 = vcmp.eq.f32.partialorder %v1770, 8.507059e+37
        %v1772 = vand.u32 %v1647, 2147483648
        %v1773 = vor.u32 1.1754944e-38, %v1772
        %v1774 = vsel %vm1771, %v1773, %v1769
        %v1775 = vmul.f32 1.0, %v1774
        %v1776 = vrcp.pop %v1648
        %v1777 = vmul.f32 %v1648, %v1776
        %v1778 = vsub.f32 1.0, %v1777
        %v1779 = vmul.f32 %v1776, %v1778
        %v1780 = vadd.f32 %v1776, %v1779
        %vm1781 = vweird.f32 %v1648
        %vm1782 = vweird.f32 %v1776
        %vm1783 = vmor %vm1781, %vm1782
        %v1784 = vsel %vm1783, %v1776, %v1780
        %v1785 = vand.u32 2147483647, %v1648
        %vm1786 = vcmp.eq.f32.partialorder %v1785, 8.507059e+37
        %v1787 = vand.u32 %v1648, 2147483648
        %v1788 = vor.u32 1.1754944e-38, %v1787
        %v1789 = vsel %vm1786, %v1788, %v1784
        %v1790 = vmul.f32 1.0, %v1789
        %v1791 = vrcp.pop %v1649
        %v1792 = vmul.f32 %v1649, %v1791
        %v1793 = vsub.f32 1.0, %v1792
        %v1794 = vmul.f32 %v1791, %v1793
        %v1795 = vadd.f32 %v1791, %v1794
        %vm1796 = vweird.f32 %v1649
        %vm1797 = vweird.f32 %v1791
        %vm1798 = vmor %vm1796, %vm1797
        %v1799 = vsel %vm1798, %v1791, %v1795
        %v1800 = vand.u32 2147483647, %v1649
        %vm1801 = vcmp.eq.f32.partialorder %v1800, 8.507059e+37
        %v1802 = vand.u32 %v1649, 2147483648
        %v1803 = vor.u32 1.1754944e-38, %v1802
        %v1804 = vsel %vm1801, %v1803, %v1799
        %v1805 = vmul.f32 1.0, %v1804
        %v1806 = vrcp.pop %v1650
        %v1807 = vmul.f32 %v1650, %v1806
        %v1808 = vsub.f32 1.0, %v1807
        %v1809 = vmul.f32 %v1806, %v1808
        %v1810 = vadd.f32 %v1806, %v1809
        %vm1811 = vweird.f32 %v1650
        %vm1812 = vweird.f32 %v1806
        %vm1813 = vmor %vm1811, %vm1812
        %v1814 = vsel %vm1813, %v1806, %v1810
        %v1815 = vand.u32 2147483647, %v1650
        %vm1816 = vcmp.eq.f32.partialorder %v1815, 8.507059e+37
        %v1817 = vand.u32 %v1650, 2147483648
        %v1818 = vor.u32 1.1754944e-38, %v1817
        %v1819 = vsel %vm1816, %v1818, %v1814
        %v1820 = vmul.f32 1.0, %v1819
        %v1821 = vrcp.pop %v1651
        %v1822 = vmul.f32 %v1651, %v1821
        %v1823 = vsub.f32 1.0, %v1822
        %v1824 = vmul.f32 %v1821, %v1823
        %v1825 = vadd.f32 %v1821, %v1824
        %vm1826 = vweird.f32 %v1651
        %vm1827 = vweird.f32 %v1821
        %vm1828 = vmor %vm1826, %vm1827
        %v1829 = vsel %vm1828, %v1821, %v1825
        %v1830 = vand.u32 2147483647, %v1651
        %vm1831 = vcmp.eq.f32.partialorder %v1830, 8.507059e+37
        %v1832 = vand.u32 %v1651, 2147483648
        %v1833 = vor.u32 1.1754944e-38, %v1832
        %v1834 = vsel %vm1831, %v1833, %v1829
        %v1835 = vmul.f32 1.0, %v1834
        %v1836 = vrcp.pop %v1652
        %v1837 = vmul.f32 %v1652, %v1836
        %v1838 = vsub.f32 1.0, %v1837
        %v1839 = vmul.f32 %v1836, %v1838
        %v1840 = vadd.f32 %v1836, %v1839
        %vm1841 = vweird.f32 %v1652
        %vm1842 = vweird.f32 %v1836
        %vm1843 = vmor %vm1841, %vm1842
        %v1844 = vsel %vm1843, %v1836, %v1840
        %v1845 = vand.u32 2147483647, %v1652
        %vm1846 = vcmp.eq.f32.partialorder %v1845, 8.507059e+37
        %v1847 = vand.u32 %v1652, 2147483648
        %v1848 = vor.u32 1.1754944e-38, %v1847
        %v1849 = vsel %vm1846, %v1848, %v1844
        %v1850 = vmul.f32 1.0, %v1849
        %v1851 = vrcp.pop %v1653
        %v1852 = vmul.f32 %v1653, %v1851
        %v1853 = vsub.f32 1.0, %v1852
        %v1854 = vmul.f32 %v1851, %v1853
        %v1855 = vadd.f32 %v1851, %v1854
        %vm1856 = vweird.f32 %v1653
        %vm1857 = vweird.f32 %v1851
        %vm1858 = vmor %vm1856, %vm1857
        %v1859 = vsel %vm1858, %v1851, %v1855
        %v1860 = vand.u32 2147483647, %v1653
        %vm1861 = vcmp.eq.f32.partialorder %v1860, 8.507059e+37
        %v1862 = vand.u32 %v1653, 2147483648
        %v1863 = vor.u32 1.1754944e-38, %v1862
        %v1864 = vsel %vm1861, %v1863, %v1859
        %v1865 = vmul.f32 1.0, %v1864
        %v1866 = vrcp.pop %v1654
        %v1867 = vmul.f32 %v1654, %v1866
        %v1868 = vsub.f32 1.0, %v1867
        %v1869 = vmul.f32 %v1866, %v1868
        %v1870 = vadd.f32 %v1866, %v1869
        %vm1871 = vweird.f32 %v1654
        %vm1872 = vweird.f32 %v1866
        %vm1873 = vmor %vm1871, %vm1872
        %v1874 = vsel %vm1873, %v1866, %v1870
        %v1875 = vand.u32 2147483647, %v1654
        %vm1876 = vcmp.eq.f32.partialorder %v1875, 8.507059e+37
        %v1877 = vand.u32 %v1654, 2147483648
        %v1878 = vor.u32 1.1754944e-38, %v1877
        %v1879 = vsel %vm1876, %v1878, %v1874
        %v1880 = vmul.f32 1.0, %v1879
        %v1881 = vrcp.pop %v1655
        %v1882 = vmul.f32 %v1655, %v1881
        %v1883 = vsub.f32 1.0, %v1882
        %v1884 = vmul.f32 %v1881, %v1883
        %v1885 = vadd.f32 %v1881, %v1884
        %vm1886 = vweird.f32 %v1655
        %vm1887 = vweird.f32 %v1881
        %vm1888 = vmor %vm1886, %vm1887
        %v1889 = vsel %vm1888, %v1881, %v1885
        %v1890 = vand.u32 2147483647, %v1655
        %vm1891 = vcmp.eq.f32.partialorder %v1890, 8.507059e+37
        %v1892 = vand.u32 %v1655, 2147483648
        %v1893 = vor.u32 1.1754944e-38, %v1892
        %v1894 = vsel %vm1891, %v1893, %v1889
        %v1895 = vmul.f32 1.0, %v1894
        %v1896 = vpack.c.bf16 %v1670, %v1670
        %v1897 = vpack.c.bf16 %v1685, %v1685
        %v1898 = vpack.c.bf16 %v1700, %v1700
        %v1899 = vpack.c.bf16 %v1715, %v1715
        %v1900 = vpack.c.bf16 %v1730, %v1730
        %v1901 = vpack.c.bf16 %v1745, %v1745
        %v1902 = vpack.c.bf16 %v1760, %v1760
        %v1903 = vpack.c.bf16 %v1775, %v1775
        %v1904 = vpack.c.bf16 %v1790, %v1790
        %v1905 = vpack.c.bf16 %v1805, %v1805
        %v1906 = vpack.c.bf16 %v1820, %v1820
        %v1907 = vpack.c.bf16 %v1835, %v1835
        %v1908 = vpack.c.bf16 %v1850, %v1850
        %v1909 = vpack.c.bf16 %v1865, %v1865
        %v1910 = vpack.c.bf16 %v1880, %v1880
        %v1911 = vpack.c.bf16 %v1895, %v1895
        %1912 = vst [vmem:[%s293] sm:$0xf] %v1896
        %1913 = vst [vmem:[%s293 + $0x4] sm:$0xf] %v1897
        %1914 = vst [vmem:[%s293 + $0x8] sm:$0xf] %v1898
        %1915 = vst [vmem:[%s293 + $0xc] sm:$0xf] %v1899
        %1916 = vst [vmem:[%s293 + $0x10] sm:$0xf] %v1900
        %1917 = vst [vmem:[%s293 + $0x14] sm:$0xf] %v1901
        %1918 = vst [vmem:[%s293 + $0x18] sm:$0xf] %v1902
        %1919 = vst [vmem:[%s293 + $0x1c] sm:$0xf] %v1903
        %1920 = vst [vmem:[%s293 + $0x20] sm:$0xf] %v1904
        %1921 = vst [vmem:[%s293 + $0x24] sm:$0xf] %v1905
        %1922 = vst [vmem:[%s293 + $0x28] sm:$0xf] %v1906
        %1923 = vst [vmem:[%s293 + $0x2c] sm:$0xf] %v1907
        %1924 = vst [vmem:[%s293 + $0x30] sm:$0xf] %v1908
        %1925 = vst [vmem:[%s293 + $0x34] sm:$0xf] %v1909
        %1926 = vst [vmem:[%s293 + $0x38] sm:$0xf] %v1910
        %1927 = vst [vmem:[%s293 + $0x3c] sm:$0xf] %v1911
        %s1928 = sand.u32 %s142, 1
        %s1929 = scalar_lea.sflag [#allocation4], %s1928
        %s1930 = sand.u32 %s142, 1
        %s1931 = smul.addr %s1930, 64
        %s1932 = scalar_lea.vmem [#allocation10], %s1931
        // Predicated region
        $region57: #{discriminator_forward.1} parent=39 // pred_check
          %p1933 = pneg %p152
        $region58: #{discriminator_forward.1} parent=39 // pred_check_branch
          %1935 = sbr.rel (%p1933) target = $region60
        $region59: #{discriminator_forward.1} parent=39 // pred_region
          %s1936 = smul.u32 16, %s24
          %1938 = vsyncadd %s1929, 0
          %s1939 = smul.addr %s1936, 4
          %s1940 = scalar_lea.hbm %s5, %s1939
          %s1941 = sshll.u32 %s1932, 4
          %s1942 = int_to_ptr.vmem [resolvable:$true] %s1941
          %s1943 = sshll.u32 %s1940, 4
          %s1944 = int_to_ptr.hbm [resolvable:$true] %s1943
          %1949 = dma.vmem_to_hbm [thread:$0]  %s1942, 1024, %s1944, %s1929, 64, 64, 4
        $region60: #{discriminator_forward.1} parent=39 // pred_fallthru
          _
      $region40: #{discriminator_forward.1} parent=5 // pred_fallthru
        _
      %p1950 = scmp.le.s32.totalorder 2, %s19
      // Predicated region
      $region61: #{discriminator_forward.1} parent=5 // pred_check
        %p1951 = pneg %p1950
      $region62: #{discriminator_forward.1} parent=5 // pred_check_branch
        %1953 = sbr.rel (%p1951) target = $region64
      $region63: #{discriminator_forward.1} parent=5 // pred_region
        %s1954 = ssub.s32 %s19, 2
        // Predicated region
        $region65: #{discriminator_forward.1} parent=63 // pred_check
          %p1955 = pneg %p158
        $region66: #{discriminator_forward.1} parent=63 // pred_check_branch
          %1957 = sbr.rel (%p1955) target = $region68
        $region67: #{discriminator_forward.1} parent=63 // pred_region
          %s1958 = sand.u32 %s143, 1
          %s1959 = scalar_lea.sflag [#allocation4], %s1958
          %s1960 = sand.u32 %s143, 1
          %s1961 = smul.addr %s1960, 64
          %s1962 = scalar_lea.vmem [#allocation10], %s1961
          %1964 = dma.done %s1959, 1024
        $region68: #{discriminator_forward.1} parent=63 // pred_fallthru
          _
      $region64: #{discriminator_forward.1} parent=5 // pred_fallthru
        _
    $region6: #{discriminator_forward.1} parent=1 // loop_footer
      %s23 = sadd.s32 1, %s19
    $region7: #{discriminator_forward.1} parent=1 // loop_footer_branch
      %18 = sbr.rel target = $region3
    $region8: #{discriminator_forward.1} parent=1 // loop_exit
      _
    %1965 = vsyncpa [#allocation3], 1
    %s1966 = scalar_lea.sflag [#allocation3], 1
    %1967 = vsyncpa %s1966, 1
    %1968 = vsyncpa [#allocation6], 1
    %1969 = vsyncpa [#allocation9], 1
    %1970 = vsyncpa [#allocation4], 1
    %s1971 = scalar_lea.sflag [#allocation4], 1
    %1972 = vsyncpa %s1971, 1

</llo_original>
